<compile_context>
chip_gen: v6e
topology: v6e:2x2x1
jax: 0.10.0
libtpu: 0.0.40
codegen_flags: <defaults>
</compile_context>

<pallas_src>
import math
import functools

import jax
import jax.numpy as jnp
from jax.experimental import pallas as pl
from jax.experimental.pallas import tpu as pltpu


# --------------------------------------------------------------------------
# In-kernel math helpers (f32 element-wise, VPU/EUP friendly).
# --------------------------------------------------------------------------
def _layernorm(x, gamma, beta, eps=1e-5):
    mu = jnp.mean(x, axis=-1, keepdims=True)
    var = jnp.mean((x - mu) ** 2, axis=-1, keepdims=True)
    return (x - mu) * jax.lax.rsqrt(var + eps) * gamma + beta


def _erf_approx(x):
    # Abramowitz & Stegun 7.1.26 rational approximation, |err| <= 1.5e-7.
    # Uses only exp (EUP slot) + VPU ops, guaranteed to lower in Mosaic.
    a1, a2, a3, a4, a5 = (0.254829592, -0.284496736, 1.421413741,
                          -1.453152027, 1.061405429)
    p = 0.3275911
    sgn = jnp.where(x >= 0.0, 1.0, -1.0)
    ax = jnp.abs(x)
    t = 1.0 / (1.0 + p * ax)
    poly = ((((a5 * t + a4) * t + a3) * t + a2) * t + a1) * t
    return sgn * (1.0 - poly * jnp.exp(-ax * ax))


def _gelu_exact(x):
    # torch nn.GELU() default: exact erf-based GELU (erf via A&S approx).
    return 0.5 * x * (1.0 + _erf_approx(x * (1.0 / math.sqrt(2.0))))


# --------------------------------------------------------------------------
# Kernel
# --------------------------------------------------------------------------
def ssl_mlp_kernel(h_ref,
                   w1_ref, b1_ref, g1_ref, be1_ref,
                   w2_ref, b2_ref, g2_ref, be2_ref,
                   w3_ref, b3_ref,
                   o_ref,
                   acc_ref,
                   *, seq_len, tt, mask_t):
    t = pl.program_id(1)

    @pl.when(t == 0)
    def _init():
        acc_ref[...] = jnp.zeros_like(acc_ref)

    # ---- Hot loop: pooled sum only (pure VPU work, hides under the h DMA).
    h = h_ref[...]                                          # (TB, TT, F)
    if mask_t:
        # Last T tile is padded with undefined data: zero out rows >= T.
        remaining = seq_len - t * tt                        # scalar int32
        row = jax.lax.broadcasted_iota(jnp.int32, (tt, 1), 0)
        h = jnp.where(row < remaining, h, 0)
    # Up-cast fuses into the reduction (no full f32 copy of the tile).
    acc_ref[...] += jnp.sum(h, axis=1, dtype=jnp.float32)   # (TB, F)

    # ---- Epilogue: the (tiny) MLP head runs once per batch tile.
    @pl.when(t == pl.num_programs(1) - 1)
    def _finalize():
        w1 = w1_ref[...]
        w2 = w2_ref[...]
        w3 = w3_ref[...]
        cdt = w1.dtype                                      # matmul compute dtype

        # mean(h) @ W1 == (sum_t h) * (1/T) @ W1
        pooled = acc_ref[...] * (1.0 / seq_len)             # (TB, F) f32

        x = jnp.dot(pooled.astype(cdt), w1,
                    preferred_element_type=jnp.float32) + b1_ref[...]
        x = _layernorm(x, g1_ref[...], be1_ref[...])
        x = _gelu_exact(x)                                  # Dropout = identity

        x = jnp.dot(x.astype(cdt), w2,
                    preferred_element_type=jnp.float32) + b2_ref[...]
        x = _layernorm(x, g2_ref[...], be2_ref[...])
        x = _gelu_exact(x)                                  # Dropout = identity

        y = jnp.dot(x.astype(cdt), w3,
                    preferred_element_type=jnp.float32) + b3_ref[...]
        o_ref[...] = y.astype(o_ref.dtype)


# --------------------------------------------------------------------------
# Wrapper
# --------------------------------------------------------------------------
def _vmem_capacity_bytes():
    """Physical VMEM per core; conservative (v7x) fallback if undetectable."""
    try:
        return int(pltpu.get_tpu_info().vmem_capacity_bytes)
    except Exception:
        return 64 * 1024 * 1024


def _pick_tb(B, target=128):
    """Largest 8-aligned divisor of B (or B itself) <= target; when B >= 16,
    cap at B//2 so the 'parallel' axis has >= 2 tiles (keeps both v7x
    TensorCores busy during the dominant streaming phase)."""
    cap = min(target, B // 2) if B >= 16 else min(target, B)
    cands = [d for d in range(1, B + 1)
             if B % d == 0 and (d % 8 == 0 or d == B)]
    fitting = [d for d in cands if d <= cap]
    return max(fitting) if fitting else min(cands)


@functools.partial(jax.jit, static_argnames=("tb", "tt", "weight_dtype"))
def ssl_mlp_forward(hidden_states, params, *, tb=None, tt=None,
                    weight_dtype=jnp.bfloat16):
    """hidden_states: (B, T, F) — the ssl_model's last_hidden_state (f32/bf16)."""
    B, T, F = hidden_states.shape
    H = params["w1"].shape[1]
    C = params["w3"].shape[1]

    h_isz = jnp.dtype(hidden_states.dtype).itemsize
    w_isz = jnp.dtype(weight_dtype).itemsize
    sub_align = 16 if h_isz == 2 else 8

    if tb is None:
        tb = _pick_tb(B)

    # ---- Explicit VMEM byte accounting (sized off the detected capacity,
    #      75% of physical as headroom -> ~48 MiB on v7x, ~96 MiB on v5e/v6e).
    vmem_target = (_vmem_capacity_bytes() * 3) // 4
    fixed = (2 * (F * H + H * H + H * C) * w_isz     # w1,w2,w3 (double-buffered)
             + 2 * (6 * H + C) * 4                   # biases / LN params (f32)
             + tb * F * 4                            # f32 pooled-sum scratch
             + 2 * tb * C * 4)                       # output block

    if tt is None:
        # Everything left goes to the double-buffered hidden_states stream.
        h_budget = max(vmem_target - fixed, 2 * tb * sub_align * F * h_isz)
        tt = h_budget // (2 * tb * F * h_isz)
        tt = max(sub_align, (tt // sub_align) * sub_align)
        if tt >= T:
            tt = T                                   # single full tile

    nb = B // tb
    nt = pl.cdiv(T, tt)                              # ragged last tile allowed
    mask_t = (T % tt) != 0

    # Cast the big matrices to the compute dtype (bf16 by default): halves
    # resident weight VMEM and gives single-pass MXU matmuls in the epilogue.
    w1 = params["w1"].astype(weight_dtype)
    w2 = params["w2"].astype(weight_dtype)
    w3 = params["w3"].astype(weight_dtype)

    def _resident(shape):
        # Constant index_map -> block stays resident in VMEM across the grid.
        return pl.BlockSpec(shape, lambda i, t: (0, 0))

    in_specs = [
        pl.BlockSpec((tb, tt, F), lambda i, t: (i, t, 0)),    # hidden_states
        _resident((F, H)),                                    # w1
        _resident((1, H)),                                    # b1
        _resident((1, H)),                                    # g1
        _resident((1, H)),                                    # be1
        _resident((H, H)),                                    # w2
        _resident((1, H)),                                    # b2
        _resident((1, H)),                                    # g2
        _resident((1, H)),                                    # be2
        _resident((H, C)),                                    # w3
        _resident((1, C)),                                    # b3
    ]
    out_spec = pl.BlockSpec((tb, C), lambda i, t: (i, 0))

    kernel = functools.partial(ssl_mlp_kernel, seq_len=T, tt=tt, mask_t=mask_t)

    return pl.pallas_call(
        kernel,
        out_shape=jax.ShapeDtypeStruct((B, C), jnp.float32),
        grid=(nb, nt),
        in_specs=in_specs,
        out_specs=out_spec,
        scratch_shapes=[pltpu.VMEM((tb, F), jnp.float32)],
        compiler_params=pltpu.CompilerParams(
            dimension_semantics=("parallel", "arbitrary"),
            vmem_limit_bytes=int(vmem_target),
        ),
    )(
        hidden_states,
        w1, params["b1"], params["g1"], params["be1"],
        w2, params["b2"], params["g2"], params["be2"],
        w3, params["b3"],
    )


# --------------------------------------------------------------------------
# Params / reference
# --------------------------------------------------------------------------
def init_params(key, feature_dim, hidden_size, num_classes):
    """Deterministic synthetic init (matches torch Linear/LayerNorm shapes)."""
    ks = jax.random.split(key, 6)

    def linear(kw, kb, fan_in, fan_out):
        bound = 1.0 / math.sqrt(fan_in)
        w = jax.random.uniform(kw, (fan_in, fan_out), jnp.float32, -bound, bound)
        b = jax.random.uniform(kb, (1, fan_out), jnp.float32, -bound, bound)
        return w, b

    w1, b1 = linear(ks[0], ks[1], feature_dim, hidden_size)
    w2, b2 = linear(ks[2], ks[3], hidden_size, hidden_size)
    w3, b3 = linear(ks[4], ks[5], hidden_size, num_classes)

    return dict(
        w1=w1, b1=b1,
        g1=jnp.ones((1, hidden_size), jnp.float32),
        be1=jnp.zeros((1, hidden_size), jnp.float32),
        w2=w2, b2=b2,
        g2=jnp.ones((1, hidden_size), jnp.float32),
        be2=jnp.zeros((1, hidden_size), jnp.float32),
        w3=w3, b3=b3,
    )


def reference_forward(hidden_states, params):
    """Pure-JAX f32 reference (exact erf GELU, high-precision dots)."""
    hp = jax.lax.Precision.HIGHEST

    def gelu(x):
        return 0.5 * x * (1.0 + jax.lax.erf(x * (1.0 / math.sqrt(2.0))))

    x = jnp.mean(hidden_states.astype(jnp.float32), axis=1)
    x = jnp.dot(x, params["w1"], precision=hp) + params["b1"]
    x = _layernorm(x, params["g1"], params["be1"])
    x = gelu(x)
    x = jnp.dot(x, params["w2"], precision=hp) + params["b2"]
    x = _layernorm(x, params["g2"], params["be2"])
    x = gelu(x)
    return jnp.dot(x, params["w3"], precision=hp) + params["b3"]


# --------------------------------------------------------------------------
if __name__ == "__main__":
    # T=50 has no nice divisors: exercises the ragged/masked last T tile.
    B, T, FEATURE_DIM = 16, 50, 64
    HIDDEN_SIZE = 32
    NUM_CLASSES = 8

    key = jax.random.PRNGKey(0)
    k_h, k_p = jax.random.split(key)

    # Stand-in for ssl_model(x).last_hidden_state; fed as bf16 to halve the
    # HBM bytes of the dominant stream (accumulation stays f32 in-kernel).
    hidden_states = jax.random.normal(
        k_h, (B, T, FEATURE_DIM), jnp.float32).astype(jnp.bfloat16)
    params = init_params(k_p, FEATURE_DIM, HIDDEN_SIZE, NUM_CLASSES)

    # tb=8 -> nb=2 (exercises the megacore 'parallel' B axis);
    # tt=16 -> nt=4 with a ragged last tile (50 = 3*16 + 2) exercising the mask.
    out = ssl_mlp_forward(hidden_states, params, tb=8, tt=16)
    out = jax.block_until_ready(out)

    ref = reference_forward(hidden_states, params)
    assert out.shape == (B, NUM_CLASSES)
    max_err = float(jnp.max(jnp.abs(out - ref)))
    # Kernel runs its matmuls in bf16 (f32 accumulation) vs the full-f32
    # reference, so allow mixed-precision-sized tolerance.
    assert jnp.allclose(out, ref, atol=3e-2, rtol=3e-2), \
        f"mismatch vs reference (max abs err {max_err})"

    print("KERNEL_OK")
</pallas_src>

<mosaic_0001>
module attributes {stable_mosaic.version = 11 : i64} {
  func.func @ssl_mlp_kernel(%arg0: i32, %arg1: i32, %arg2: memref<8x16x64xbf16, #tpu.memory_space<vmem>>, %arg3: memref<64x32xbf16, #tpu.memory_space<vmem>>, %arg4: memref<1x32xf32, #tpu.memory_space<vmem>>, %arg5: memref<1x32xf32, #tpu.memory_space<vmem>>, %arg6: memref<1x32xf32, #tpu.memory_space<vmem>>, %arg7: memref<32x32xbf16, #tpu.memory_space<vmem>>, %arg8: memref<1x32xf32, #tpu.memory_space<vmem>>, %arg9: memref<1x32xf32, #tpu.memory_space<vmem>>, %arg10: memref<1x32xf32, #tpu.memory_space<vmem>>, %arg11: memref<32x8xbf16, #tpu.memory_space<vmem>>, %arg12: memref<1x8xf32, #tpu.memory_space<vmem>>, %arg13: memref<8x8xf32, #tpu.memory_space<vmem>>, %arg14: memref<8x64xf32, #tpu.memory_space<vmem>>) attributes {dimension_semantics = [#tpu.dimension_semantics<parallel>, #tpu.dimension_semantics<arbitrary>], iteration_bounds = array<i64: 2, 4>, scalar_prefetch = 0 : i64, scratch_operands = 1 : i64, tpu.core_type = #tpu.core_type<tc>, window_params = [{transform_indices = @transform_0, window_bounds = array<i64: 8, 16, 64>}, {pipeline_mode = #tpu.pipeline_mode<synchronous>, transform_indices = @transform_1, window_bounds = array<i64: 64, 32>}, {pipeline_mode = #tpu.pipeline_mode<synchronous>, transform_indices = @transform_2, window_bounds = array<i64: 1, 32>}, {pipeline_mode = #tpu.pipeline_mode<synchronous>, transform_indices = @transform_3, window_bounds = array<i64: 1, 32>}, {pipeline_mode = #tpu.pipeline_mode<synchronous>, transform_indices = @transform_4, window_bounds = array<i64: 1, 32>}, {pipeline_mode = #tpu.pipeline_mode<synchronous>, transform_indices = @transform_5, window_bounds = array<i64: 32, 32>}, {pipeline_mode = #tpu.pipeline_mode<synchronous>, transform_indices = @transform_6, window_bounds = array<i64: 1, 32>}, {pipeline_mode = #tpu.pipeline_mode<synchronous>, transform_indices = @transform_7, window_bounds = array<i64: 1, 32>}, {pipeline_mode = #tpu.pipeline_mode<synchronous>, transform_indices = @transform_8, window_bounds = array<i64: 1, 32>}, {pipeline_mode = #tpu.pipeline_mode<synchronous>, transform_indices = @transform_9, window_bounds = array<i64: 32, 8>}, {pipeline_mode = #tpu.pipeline_mode<synchronous>, transform_indices = @transform_10, window_bounds = array<i64: 1, 8>}, {transform_indices = @transform_11, window_bounds = array<i64: 8, 8>}]} {
    %c0_i32 = arith.constant 0 : i32
    %0 = arith.cmpi eq, %arg1, %c0_i32 : i32
    %1 = arith.extui %0 : i1 to i32
    %c0_i32_0 = arith.constant 0 : i32
    %2 = arith.cmpi ne, %1, %c0_i32_0 : i32
    scf.if %2 {
      %cst_9 = arith.constant 0.000000e+00 : f32
      %22 = vector.broadcast %cst_9 : f32 to vector<8x64xf32>
      %c0_10 = arith.constant 0 : index
      %c0_11 = arith.constant 0 : index
      %23 = vector.load %arg14[%c0_10, %c0_11] : memref<8x64xf32, #tpu.memory_space<vmem>>, vector<8x64xf32>
      tpu.vector_store %arg14[%c0_10, %c0_11], %22 {strides = array<i32>} : memref<8x64xf32, #tpu.memory_space<vmem>>, vector<8x64xf32>,
    } else {
    }
    %c0 = arith.constant 0 : index
    %c0_1 = arith.constant 0 : index
    %c0_2 = arith.constant 0 : index
    %3 = vector.load %arg2[%c0, %c0_1, %c0_2] : memref<8x16x64xbf16, #tpu.memory_space<vmem>>, vector<8x16x64xbf16>
    %c16_i32 = arith.constant 16 : i32
    %4 = arith.muli %arg1, %c16_i32 : i32
    %c50_i32 = arith.constant 50 : i32
    %5 = arith.subi %c50_i32, %4 : i32
    %6 = tpu.iota {dimensions = array<i32: 0>} : vector<16x1xi32>
    %7 = vector.broadcast %5 : i32 to vector<16x1xi32>
    %8 = arith.cmpi slt, %6, %7 : vector<16x1xi32>
    %c0_i32_3 = arith.constant 0 : i32
    %9 = arith.sitofp %c0_i32_3 : i32 to bf16
    %10 = vector.shape_cast %8 : vector<16x1xi1> to vector<1x16x1xi1>
    %11 = vector.broadcast %10 : vector<1x16x1xi1> to vector<8x16x64xi1>
    %12 = vector.broadcast %9 : bf16 to vector<8x16x64xbf16>
    %13 = arith.select %11, %3, %12 : vector<8x16x64xi1>, vector<8x16x64xbf16>
    %c0_4 = arith.constant 0 : index
    %c0_5 = arith.constant 0 : index
    %14 = vector.load %arg14[%c0_4, %c0_5] : memref<8x64xf32, #tpu.memory_space<vmem>>, vector<8x64xf32>
    %15 = arith.extf %13 : vector<8x16x64xbf16> to vector<8x16x64xf32>
    %cst = arith.constant dense<0.000000e+00> : vector<8x64xf32>
    %16 = vector.multi_reduction <add>, %15, %cst [1] : vector<8x16x64xf32> to vector<8x64xf32>
    %17 = arith.addf %14, %16 : vector<8x64xf32>
    %c0_6 = arith.constant 0 : index
    %c0_7 = arith.constant 0 : index
    %18 = vector.load %arg14[%c0_6, %c0_7] : memref<8x64xf32, #tpu.memory_space<vmem>>, vector<8x64xf32>
    tpu.vector_store %arg14[%c0_6, %c0_7], %17 {strides = array<i32>} : memref<8x64xf32, #tpu.memory_space<vmem>>, vector<8x64xf32>,
    %c3_i32 = arith.constant 3 : i32
    %19 = arith.cmpi eq, %arg1, %c3_i32 : i32
    %20 = arith.extui %19 : i1 to i32
    %c0_i32_8 = arith.constant 0 : i32
    %21 = arith.cmpi ne, %20, %c0_i32_8 : i32
    scf.if %21 {
      %c0_9 = arith.constant 0 : index
      %c0_10 = arith.constant 0 : index
      %22 = vector.load %arg3[%c0_9, %c0_10] : memref<64x32xbf16, #tpu.memory_space<vmem>>, vector<64x32xbf16>
      %c0_11 = arith.constant 0 : index
      %c0_12 = arith.constant 0 : index
      %23 = vector.load %arg7[%c0_11, %c0_12] : memref<32x32xbf16, #tpu.memory_space<vmem>>, vector<32x32xbf16>
      %c0_13 = arith.constant 0 : index
      %c0_14 = arith.constant 0 : index
      %24 = vector.load %arg11[%c0_13, %c0_14] : memref<32x8xbf16, #tpu.memory_space<vmem>>, vector<32x8xbf16>
      %c0_15 = arith.constant 0 : index
      %c0_16 = arith.constant 0 : index
      %25 = vector.load %arg14[%c0_15, %c0_16] : memref<8x64xf32, #tpu.memory_space<vmem>>, vector<8x64xf32>
      %cst_17 = arith.constant 2.000000e-02 : f32
      %26 = vector.broadcast %cst_17 : f32 to vector<8x64xf32>
      %27 = arith.mulf %25, %26 : vector<8x64xf32>
      %28 = arith.truncf %27 : vector<8x64xf32> to vector<8x64xbf16>
      %cst_18 = arith.constant dense<0.000000e+00> : vector<8x32xf32>
      %29 = tpu.matmul %28, %22, %cst_18 {dimension_numbers = #tpu.dot_dimension_numbers<[1], [0], [0], [1], [0, 0, 1, 1], [], []>} : vector<8x64xbf16>, vector<64x32xbf16>, vector<8x32xf32> -> vector<8x32xf32>
      %c0_19 = arith.constant 0 : index
      %c0_20 = arith.constant 0 : index
      %30 = vector.load %arg4[%c0_19, %c0_20] : memref<1x32xf32, #tpu.memory_space<vmem>>, vector<1x32xf32>
      %31 = vector.broadcast %30 : vector<1x32xf32> to vector<8x32xf32>
      %32 = arith.addf %29, %31 : vector<8x32xf32>
      %c0_21 = arith.constant 0 : index
      %c0_22 = arith.constant 0 : index
      %33 = vector.load %arg5[%c0_21, %c0_22] : memref<1x32xf32, #tpu.memory_space<vmem>>, vector<1x32xf32>
      %c0_23 = arith.constant 0 : index
      %c0_24 = arith.constant 0 : index
      %34 = vector.load %arg6[%c0_23, %c0_24] : memref<1x32xf32, #tpu.memory_space<vmem>>, vector<1x32xf32>
      %cst_25 = arith.constant dense<0.000000e+00> : vector<8xf32>
      %35 = vector.multi_reduction <add>, %32, %cst_25 [1] : vector<8x32xf32> to vector<8xf32>
      %36 = vector.shape_cast %35 : vector<8xf32> to vector<8x1xf32>
      %cst_26 = arith.constant 3.200000e+01 : f32
      %37 = vector.broadcast %cst_26 : f32 to vector<8x1xf32>
      %38 = arith.divf %36, %37 : vector<8x1xf32>
      %39 = vector.broadcast %38 : vector<8x1xf32> to vector<8x32xf32>
      %40 = arith.subf %32, %39 : vector<8x32xf32>
      %41 = arith.mulf %40, %40 : vector<8x32xf32>
      %cst_27 = arith.constant dense<0.000000e+00> : vector<8xf32>
      %42 = vector.multi_reduction <add>, %41, %cst_27 [1] : vector<8x32xf32> to vector<8xf32>
      %43 = vector.shape_cast %42 : vector<8xf32> to vector<8x1xf32>
      %cst_28 = arith.constant 3.200000e+01 : f32
      %44 = vector.broadcast %cst_28 : f32 to vector<8x1xf32>
      %45 = arith.divf %43, %44 : vector<8x1xf32>
      %46 = vector.broadcast %38 : vector<8x1xf32> to vector<8x32xf32>
      %47 = arith.subf %32, %46 : vector<8x32xf32>
      %cst_29 = arith.constant 9.99999974E-6 : f32
      %48 = vector.broadcast %cst_29 : f32 to vector<8x1xf32>
      %49 = arith.addf %45, %48 : vector<8x1xf32>
      %50 = math.rsqrt %49 : vector<8x1xf32>
      %51 = vector.broadcast %50 : vector<8x1xf32> to vector<8x32xf32>
      %52 = arith.mulf %47, %51 : vector<8x32xf32>
      %53 = vector.broadcast %33 : vector<1x32xf32> to vector<8x32xf32>
      %54 = arith.mulf %52, %53 : vector<8x32xf32>
      %55 = vector.broadcast %34 : vector<1x32xf32> to vector<8x32xf32>
      %56 = arith.addf %54, %55 : vector<8x32xf32>
      %cst_30 = arith.constant 5.000000e-01 : f32
      %57 = vector.broadcast %cst_30 : f32 to vector<8x32xf32>
      %58 = arith.mulf %57, %56 : vector<8x32xf32>
      %cst_31 = arith.constant 0.707106769 : f32
      %59 = vector.broadcast %cst_31 : f32 to vector<8x32xf32>
      %60 = arith.mulf %56, %59 : vector<8x32xf32>
      %cst_32 = arith.constant 0.000000e+00 : f32
      %61 = vector.broadcast %cst_32 : f32 to vector<8x32xf32>
      %62 = arith.cmpf oge, %60, %61 : vector<8x32xf32>
      %cst_33 = arith.constant 1.000000e+00 : f32
      %cst_34 = arith.constant -1.000000e+00 : f32
      %63 = vector.broadcast %cst_33 : f32 to vector<8x32xf32>
      %64 = vector.broadcast %cst_34 : f32 to vector<8x32xf32>
      %65 = arith.select %62, %63, %64 : vector<8x32xi1>, vector<8x32xf32>
      %66 = math.absf %60 : vector<8x32xf32>
      %cst_35 = arith.constant 0.327591091 : f32
      %67 = vector.broadcast %cst_35 : f32 to vector<8x32xf32>
      %68 = arith.mulf %67, %66 : vector<8x32xf32>
      %cst_36 = arith.constant 1.000000e+00 : f32
      %69 = vector.broadcast %cst_36 : f32 to vector<8x32xf32>
      %70 = arith.addf %69, %68 : vector<8x32xf32>
      %cst_37 = arith.constant 1.000000e+00 : f32
      %71 = vector.broadcast %cst_37 : f32 to vector<8x32xf32>
      %72 = arith.divf %71, %70 : vector<8x32xf32>
      %cst_38 = arith.constant 1.06140542 : f32
      %73 = vector.broadcast %cst_38 : f32 to vector<8x32xf32>
      %74 = arith.mulf %73, %72 : vector<8x32xf32>
      %cst_39 = arith.constant -1.45315206 : f32
      %75 = vector.broadcast %cst_39 : f32 to vector<8x32xf32>
      %76 = arith.addf %74, %75 : vector<8x32xf32>
      %77 = arith.mulf %76, %72 : vector<8x32xf32>
      %cst_40 = arith.constant 1.42141378 : f32
      %78 = vector.broadcast %cst_40 : f32 to vector<8x32xf32>
      %79 = arith.addf %77, %78 : vector<8x32xf32>
      %80 = arith.mulf %79, %72 : vector<8x32xf32>
      %cst_41 = arith.constant -0.284496725 : f32
      %81 = vector.broadcast %cst_41 : f32 to vector<8x32xf32>
      %82 = arith.addf %80, %81 : vector<8x32xf32>
      %83 = arith.mulf %82, %72 : vector<8x32xf32>
      %cst_42 = arith.constant 0.254829586 : f32
      %84 = vector.broadcast %cst_42 : f32 to vector<8x32xf32>
      %85 = arith.addf %83, %84 : vector<8x32xf32>
      %86 = arith.mulf %85, %72 : vector<8x32xf32>
      %cst_43 = arith.constant 0.000000e+00 : f32
      %87 = vector.broadcast %cst_43 : f32 to vector<8x32xf32>
      %88 = arith.subf %87, %66 : vector<8x32xf32>
      %89 = arith.mulf %88, %66 : vector<8x32xf32>
      %90 = math.exp %89 : vector<8x32xf32>
      %91 = arith.mulf %86, %90 : vector<8x32xf32>
      %cst_44 = arith.constant 1.000000e+00 : f32
      %92 = vector.broadcast %cst_44 : f32 to vector<8x32xf32>
      %93 = arith.subf %92, %91 : vector<8x32xf32>
      %94 = arith.mulf %65, %93 : vector<8x32xf32>
      %cst_45 = arith.constant 1.000000e+00 : f32
      %95 = vector.broadcast %cst_45 : f32 to vector<8x32xf32>
      %96 = arith.addf %95, %94 : vector<8x32xf32>
      %97 = arith.mulf %58, %96 : vector<8x32xf32>
      %98 = arith.truncf %97 : vector<8x32xf32> to vector<8x32xbf16>
      %cst_46 = arith.constant dense<0.000000e+00> : vector<8x32xf32>
      %99 = tpu.matmul %98, %23, %cst_46 {dimension_numbers = #tpu.dot_dimension_numbers<[1], [0], [0], [1], [0, 0, 1, 1], [], []>} : vector<8x32xbf16>, vector<32x32xbf16>, vector<8x32xf32> -> vector<8x32xf32>
      %c0_47 = arith.constant 0 : index
      %c0_48 = arith.constant 0 : index
      %100 = vector.load %arg8[%c0_47, %c0_48] : memref<1x32xf32, #tpu.memory_space<vmem>>, vector<1x32xf32>
      %101 = vector.broadcast %100 : vector<1x32xf32> to vector<8x32xf32>
      %102 = arith.addf %99, %101 : vector<8x32xf32>
      %c0_49 = arith.constant 0 : index
      %c0_50 = arith.constant 0 : index
      %103 = vector.load %arg9[%c0_49, %c0_50] : memref<1x32xf32, #tpu.memory_space<vmem>>, vector<1x32xf32>
      %c0_51 = arith.constant 0 : index
      %c0_52 = arith.constant 0 : index
      %104 = vector.load %arg10[%c0_51, %c0_52] : memref<1x32xf32, #tpu.memory_space<vmem>>, vector<1x32xf32>
      %cst_53 = arith.constant dense<0.000000e+00> : vector<8xf32>
      %105 = vector.multi_reduction <add>, %102, %cst_53 [1] : vector<8x32xf32> to vector<8xf32>
      %106 = vector.shape_cast %105 : vector<8xf32> to vector<8x1xf32>
      %cst_54 = arith.constant 3.200000e+01 : f32
      %107 = vector.broadcast %cst_54 : f32 to vector<8x1xf32>
      %108 = arith.divf %106, %107 : vector<8x1xf32>
      %109 = vector.broadcast %108 : vector<8x1xf32> to vector<8x32xf32>
      %110 = arith.subf %102, %109 : vector<8x32xf32>
      %111 = arith.mulf %110, %110 : vector<8x32xf32>
      %cst_55 = arith.constant dense<0.000000e+00> : vector<8xf32>
      %112 = vector.multi_reduction <add>, %111, %cst_55 [1] : vector<8x32xf32> to vector<8xf32>
      %113 = vector.shape_cast %112 : vector<8xf32> to vector<8x1xf32>
      %cst_56 = arith.constant 3.200000e+01 : f32
      %114 = vector.broadcast %cst_56 : f32 to vector<8x1xf32>
      %115 = arith.divf %113, %114 : vector<8x1xf32>
      %116 = vector.broadcast %108 : vector<8x1xf32> to vector<8x32xf32>
      %117 = arith.subf %102, %116 : vector<8x32xf32>
      %cst_57 = arith.constant 9.99999974E-6 : f32
      %118 = vector.broadcast %cst_57 : f32 to vector<8x1xf32>
      %119 = arith.addf %115, %118 : vector<8x1xf32>
      %120 = math.rsqrt %119 : vector<8x1xf32>
      %121 = vector.broadcast %120 : vector<8x1xf32> to vector<8x32xf32>
      %122 = arith.mulf %117, %121 : vector<8x32xf32>
      %123 = vector.broadcast %103 : vector<1x32xf32> to vector<8x32xf32>
      %124 = arith.mulf %122, %123 : vector<8x32xf32>
      %125 = vector.broadcast %104 : vector<1x32xf32> to vector<8x32xf32>
      %126 = arith.addf %124, %125 : vector<8x32xf32>
      %cst_58 = arith.constant 5.000000e-01 : f32
      %127 = vector.broadcast %cst_58 : f32 to vector<8x32xf32>
      %128 = arith.mulf %127, %126 : vector<8x32xf32>
      %cst_59 = arith.constant 0.707106769 : f32
      %129 = vector.broadcast %cst_59 : f32 to vector<8x32xf32>
      %130 = arith.mulf %126, %129 : vector<8x32xf32>
      %cst_60 = arith.constant 0.000000e+00 : f32
      %131 = vector.broadcast %cst_60 : f32 to vector<8x32xf32>
      %132 = arith.cmpf oge, %130, %131 : vector<8x32xf32>
      %cst_61 = arith.constant 1.000000e+00 : f32
      %cst_62 = arith.constant -1.000000e+00 : f32
      %133 = vector.broadcast %cst_61 : f32 to vector<8x32xf32>
      %134 = vector.broadcast %cst_62 : f32 to vector<8x32xf32>
      %135 = arith.select %132, %133, %134 : vector<8x32xi1>, vector<8x32xf32>
      %136 = math.absf %130 : vector<8x32xf32>
      %cst_63 = arith.constant 0.327591091 : f32
      %137 = vector.broadcast %cst_63 : f32 to vector<8x32xf32>
      %138 = arith.mulf %137, %136 : vector<8x32xf32>
      %cst_64 = arith.constant 1.000000e+00 : f32
      %139 = vector.broadcast %cst_64 : f32 to vector<8x32xf32>
      %140 = arith.addf %139, %138 : vector<8x32xf32>
      %cst_65 = arith.constant 1.000000e+00 : f32
      %141 = vector.broadcast %cst_65 : f32 to vector<8x32xf32>
      %142 = arith.divf %141, %140 : vector<8x32xf32>
      %cst_66 = arith.constant 1.06140542 : f32
      %143 = vector.broadcast %cst_66 : f32 to vector<8x32xf32>
      %144 = arith.mulf %143, %142 : vector<8x32xf32>
      %cst_67 = arith.constant -1.45315206 : f32
      %145 = vector.broadcast %cst_67 : f32 to vector<8x32xf32>
      %146 = arith.addf %144, %145 : vector<8x32xf32>
      %147 = arith.mulf %146, %142 : vector<8x32xf32>
      %cst_68 = arith.constant 1.42141378 : f32
      %148 = vector.broadcast %cst_68 : f32 to vector<8x32xf32>
      %149 = arith.addf %147, %148 : vector<8x32xf32>
      %150 = arith.mulf %149, %142 : vector<8x32xf32>
      %cst_69 = arith.constant -0.284496725 : f32
      %151 = vector.broadcast %cst_69 : f32 to vector<8x32xf32>
      %152 = arith.addf %150, %151 : vector<8x32xf32>
      %153 = arith.mulf %152, %142 : vector<8x32xf32>
      %cst_70 = arith.constant 0.254829586 : f32
      %154 = vector.broadcast %cst_70 : f32 to vector<8x32xf32>
      %155 = arith.addf %153, %154 : vector<8x32xf32>
      %156 = arith.mulf %155, %142 : vector<8x32xf32>
      %cst_71 = arith.constant 0.000000e+00 : f32
      %157 = vector.broadcast %cst_71 : f32 to vector<8x32xf32>
      %158 = arith.subf %157, %136 : vector<8x32xf32>
      %159 = arith.mulf %158, %136 : vector<8x32xf32>
      %160 = math.exp %159 : vector<8x32xf32>
      %161 = arith.mulf %156, %160 : vector<8x32xf32>
      %cst_72 = arith.constant 1.000000e+00 : f32
      %162 = vector.broadcast %cst_72 : f32 to vector<8x32xf32>
      %163 = arith.subf %162, %161 : vector<8x32xf32>
      %164 = arith.mulf %135, %163 : vector<8x32xf32>
      %cst_73 = arith.constant 1.000000e+00 : f32
      %165 = vector.broadcast %cst_73 : f32 to vector<8x32xf32>
      %166 = arith.addf %165, %164 : vector<8x32xf32>
      %167 = arith.mulf %128, %166 : vector<8x32xf32>
      %168 = arith.truncf %167 : vector<8x32xf32> to vector<8x32xbf16>
      %cst_74 = arith.constant dense<0.000000e+00> : vector<8x8xf32>
      %169 = tpu.matmul %168, %24, %cst_74 {dimension_numbers = #tpu.dot_dimension_numbers<[1], [0], [0], [1], [0, 0, 1, 1], [], []>} : vector<8x32xbf16>, vector<32x8xbf16>, vector<8x8xf32> -> vector<8x8xf32>
      %c0_75 = arith.constant 0 : index
      %c0_76 = arith.constant 0 : index
      %170 = vector.load %arg12[%c0_75, %c0_76] : memref<1x8xf32, #tpu.memory_space<vmem>>, vector<1x8xf32>
      %171 = vector.broadcast %170 : vector<1x8xf32> to vector<8x8xf32>
      %172 = arith.addf %169, %171 : vector<8x8xf32>
      %c0_77 = arith.constant 0 : index
      %c0_78 = arith.constant 0 : index
      %173 = vector.load %arg13[%c0_77, %c0_78] : memref<8x8xf32, #tpu.memory_space<vmem>>, vector<8x8xf32>
      tpu.vector_store %arg13[%c0_77, %c0_78], %172 {strides = array<i32>} : memref<8x8xf32, #tpu.memory_space<vmem>>, vector<8x8xf32>,
    } else {
    }
    return
  }
  func.func @transform_0(%arg0: i32, %arg1: i32) -> (i32, i32, i32) {
    %c0_i32 = arith.constant 0 : i32
    %c0_i32_0 = arith.constant 0 : i32
    return %arg0, %arg1, %c0_i32 : i32, i32, i32
  }
  func.func @transform_1(%arg0: i32, %arg1: i32) -> (i32, i32) {
    %c0_i32 = arith.constant 0 : i32
    %c0_i32_0 = arith.constant 0 : i32
    %c0_i32_1 = arith.constant 0 : i32
    return %c0_i32, %c0_i32_0 : i32, i32
  }
  func.func @transform_2(%arg0: i32, %arg1: i32) -> (i32, i32) {
    %c0_i32 = arith.constant 0 : i32
    %c0_i32_0 = arith.constant 0 : i32
    %c0_i32_1 = arith.constant 0 : i32
    return %c0_i32, %c0_i32_0 : i32, i32
  }
  func.func @transform_3(%arg0: i32, %arg1: i32) -> (i32, i32) {
    %c0_i32 = arith.constant 0 : i32
    %c0_i32_0 = arith.constant 0 : i32
    %c0_i32_1 = arith.constant 0 : i32
    return %c0_i32, %c0_i32_0 : i32, i32
  }
  func.func @transform_4(%arg0: i32, %arg1: i32) -> (i32, i32) {
    %c0_i32 = arith.constant 0 : i32
    %c0_i32_0 = arith.constant 0 : i32
    %c0_i32_1 = arith.constant 0 : i32
    return %c0_i32, %c0_i32_0 : i32, i32
  }
  func.func @transform_5(%arg0: i32, %arg1: i32) -> (i32, i32) {
    %c0_i32 = arith.constant 0 : i32
    %c0_i32_0 = arith.constant 0 : i32
    %c0_i32_1 = arith.constant 0 : i32
    return %c0_i32, %c0_i32_0 : i32, i32
  }
  func.func @transform_6(%arg0: i32, %arg1: i32) -> (i32, i32) {
    %c0_i32 = arith.constant 0 : i32
    %c0_i32_0 = arith.constant 0 : i32
    %c0_i32_1 = arith.constant 0 : i32
    return %c0_i32, %c0_i32_0 : i32, i32
  }
  func.func @transform_7(%arg0: i32, %arg1: i32) -> (i32, i32) {
    %c0_i32 = arith.constant 0 : i32
    %c0_i32_0 = arith.constant 0 : i32
    %c0_i32_1 = arith.constant 0 : i32
    return %c0_i32, %c0_i32_0 : i32, i32
  }
  func.func @transform_8(%arg0: i32, %arg1: i32) -> (i32, i32) {
    %c0_i32 = arith.constant 0 : i32
    %c0_i32_0 = arith.constant 0 : i32
    %c0_i32_1 = arith.constant 0 : i32
    return %c0_i32, %c0_i32_0 : i32, i32
  }
  func.func @transform_9(%arg0: i32, %arg1: i32) -> (i32, i32) {
    %c0_i32 = arith.constant 0 : i32
    %c0_i32_0 = arith.constant 0 : i32
    %c0_i32_1 = arith.constant 0 : i32
    return %c0_i32, %c0_i32_0 : i32, i32
  }
  func.func @transform_10(%arg0: i32, %arg1: i32) -> (i32, i32) {
    %c0_i32 = arith.constant 0 : i32
    %c0_i32_0 = arith.constant 0 : i32
    %c0_i32_1 = arith.constant 0 : i32
    return %c0_i32, %c0_i32_0 : i32, i32
  }
  func.func @transform_11(%arg0: i32, %arg1: i32) -> (i32, i32) {
    %c0_i32 = arith.constant 0 : i32
    %c0_i32_0 = arith.constant 0 : i32
    return %arg0, %c0_i32 : i32, i32
  }
}

</mosaic_0001>

<llo_original>
// kernel: ssl_mlp_forward.1
$region0: #{ssl_mlp_forward.1}
  #allocation0 [shape = 'u32[]', space=smem, size = 0x4, offset = 0x4, fixed_abs, tag = 'smem constant byte address 0x4 - core index']
  #allocation1 [shape = 'u32[144,128]{1,0:T(1,128)}', space=vmem, size = 0x12000, scoped, tag = 'internal scratch']
  #allocation2 [shape = 'f32[8,64]{1,0:T(8,128)}', space=vmem, size = 0x1000, scoped, tag = 'scratch operand']
  %s0 = inlined_call_operand.vmem [shape: bf16[16,50,64], index: 0, kind: input, shape index: {}]
  %s1 = inlined_call_operand.vmem [shape: bf16[64,32], index: 1, kind: input, shape index: {}]
  %s2 = inlined_call_operand.vmem [shape: f32[1,32], index: 2, kind: input, shape index: {}]
  %s3 = inlined_call_operand.vmem [shape: f32[1,32], index: 3, kind: input, shape index: {}]
  %s4 = inlined_call_operand.vmem [shape: f32[1,32], index: 4, kind: input, shape index: {}]
  %s5 = inlined_call_operand.vmem [shape: bf16[32,32], index: 5, kind: input, shape index: {}]
  %s6 = inlined_call_operand.vmem [shape: f32[1,32], index: 6, kind: input, shape index: {}]
  %s7 = inlined_call_operand.vmem [shape: f32[1,32], index: 7, kind: input, shape index: {}]
  %s8 = inlined_call_operand.vmem [shape: f32[1,32], index: 8, kind: input, shape index: {}]
  %s9 = inlined_call_operand.vmem [shape: bf16[32,8], index: 9, kind: input, shape index: {}]
  %s10 = inlined_call_operand.vmem [shape: f32[1,8], index: 10, kind: input, shape index: {}]
  %s11 = inlined_call_operand.vmem [shape: f32[16,8], index: 11, kind: output, shape index: {}]
  %s12 = sld [smem:[#allocation0]]
  $region147: #{ssl_mlp_forward.1} parent=0
    _
  %s14 = ssub.s32 1, %s12
  %s15 = scalar_select 0, %s14, %s12
  $region1: #{ssl_mlp_forward.1} parent=0
    #allocation3 [shape = 'u8[65536]{0}', space=vmem, size = 0x10000, scoped, tag = 'input window, operand 0']
    loop: start=0, step=1, limit=10
    $region2: #{ssl_mlp_forward.1} parent=1 // loop_pre_header
      _
    $region3: #{ssl_mlp_forward.1} parent=1 // loop_header
      %s17 = sphi 0, %s21
      %p18 = scmp.ge.s32.totalorder %s17, 10
      %s24 = sphi 0, %s36
      %s25 = sphi 0, %s32
      %s26 = sphi 0, %s24
      %s27 = sphi 0, %s25
      %s28 = sphi 0, %s26
      %s29 = sphi 0, %s27
      %s41 = sphi 0, %s43
      %s44 = sphi 0, %s41
      %s45 = sphi 0, %s44
      %s61 = sphi 0, %s45
      %s65 = sphi 0, %s65
      %s67 = sphi 0, %s65
      %s68 = sphi 0, %s67
      %s82 = sphi 0, %s68
      %s86 = sphi 0, %s86
      %s88 = sphi 0, %s86
      %s89 = sphi 0, %s88
      %s103 = sphi 0, %s89
      %s107 = sphi 0, %s107
      %s109 = sphi 0, %s107
      %s110 = sphi 0, %s109
      %s124 = sphi 0, %s110
      %s128 = sphi 0, %s128
      %s130 = sphi 0, %s128
      %s131 = sphi 0, %s130
      %s145 = sphi 0, %s131
      %s149 = sphi 0, %s149
      %s151 = sphi 0, %s149
      %s152 = sphi 0, %s151
      %s166 = sphi 0, %s152
      %s170 = sphi 0, %s170
      %s172 = sphi 0, %s170
      %s173 = sphi 0, %s172
      %s187 = sphi 0, %s173
      %s191 = sphi 0, %s191
      %s193 = sphi 0, %s191
      %s194 = sphi 0, %s193
      %s208 = sphi 0, %s194
      %s212 = sphi 0, %s212
      %s214 = sphi 0, %s212
      %s215 = sphi 0, %s214
      %s229 = sphi 0, %s215
      %s233 = sphi 0, %s233
      %s235 = sphi 0, %s233
      %s236 = sphi 0, %s235
      %s250 = sphi 0, %s236
      %s254 = sphi 0, %s254
      %s256 = sphi 0, %s254
      %s257 = sphi 0, %s256
      %s271 = sphi 0, %s257
      %s277 = sphi 0, %s279
      %s280 = sphi 0, %s277
      %s281 = sphi 0, %s280
      %s297 = sphi 0, %s281
    $region4: #{ssl_mlp_forward.1} parent=1 // loop_header_branch
      %20 = sbr.rel (%p18) target = $region8
    $region5: #{ssl_mlp_forward.1} parent=1 // loop_body
      %s22 = ssub.s32 %s17, 1
      %s23 = ssub.s32 %s17, 2
      %s30 = sadd.s32 1, %s25
      %p31 = scmp.ge.s32.totalorder %s30, 4
      %s32 = scalar_select %p31, 0, %s30
      %s33 = sadd.s32 1, %s24
      %s34 = scalar_select %p31, %s33, %s24
      %p35 = scmp.ge.s32.totalorder %s34, 2
      %s36 = scalar_select %p35, 0, %s34
      %s37 = ssub.s32 %s24, %s36
      %s38 = ssub.s32 %s25, %s32
      %s39 = sor.u32 %s37, %s38
      %p40 = scmp.eq.s32.totalorder %s39, 0
      %s42 = sadd.s32 %s41, 1
      %s43 = scalar_select %p40, %s41, %s42
      %p46 = pneg %p40
      %p47 = scmp.eq.s32.totalorder %s17, 7
      %p48 = por %p46, %p47
      %p49 = scmp.ne.s32.totalorder %s41, %s44
      %p50 = scmp.eq.s32.totalorder %s17, 0
      %p51 = por %p49, %p50
      %p52 = scmp.ne.s32.totalorder %s41, %s44
      %p53 = scmp.eq.s32.totalorder %s22, 7
      %p54 = por %p52, %p53
      %p55 = scmp.ne.s32.totalorder %s44, %s45
      %p56 = scmp.eq.s32.totalorder %s22, 0
      %p57 = por %p55, %p56
      %p58 = scmp.ne.s32.totalorder %s44, %s45
      %p59 = scmp.eq.s32.totalorder %s23, 7
      %p60 = por %p58, %p59
      %p62 = scmp.ne.s32.totalorder %s45, %s61
      %p63 = scmp.eq.s32.totalorder %s23, 0
      %p64 = por %p62, %p63
      %s66 = sadd.s32 %s65, 1
      %p69 = scmp.eq.s32.totalorder %s17, 7
      %p70 = scmp.ne.s32.totalorder %s65, %s67
      %p71 = scmp.eq.s32.totalorder %s17, 0
      %p72 = por %p70, %p71
      %p73 = scmp.ne.s32.totalorder %s65, %s67
      %p74 = scmp.eq.s32.totalorder %s22, 7
      %p75 = por %p73, %p74
      %p76 = scmp.ne.s32.totalorder %s67, %s68
      %p77 = scmp.eq.s32.totalorder %s22, 0
      %p78 = por %p76, %p77
      %p79 = scmp.ne.s32.totalorder %s67, %s68
      %p80 = scmp.eq.s32.totalorder %s23, 7
      %p81 = por %p79, %p80
      %p83 = scmp.ne.s32.totalorder %s68, %s82
      %p84 = scmp.eq.s32.totalorder %s23, 0
      %p85 = por %p83, %p84
      %s87 = sadd.s32 %s86, 1
      %p90 = scmp.eq.s32.totalorder %s17, 7
      %p91 = scmp.ne.s32.totalorder %s86, %s88
      %p92 = scmp.eq.s32.totalorder %s17, 0
      %p93 = por %p91, %p92
      %p94 = scmp.ne.s32.totalorder %s86, %s88
      %p95 = scmp.eq.s32.totalorder %s22, 7
      %p96 = por %p94, %p95
      %p97 = scmp.ne.s32.totalorder %s88, %s89
      %p98 = scmp.eq.s32.totalorder %s22, 0
      %p99 = por %p97, %p98
      %p100 = scmp.ne.s32.totalorder %s88, %s89
      %p101 = scmp.eq.s32.totalorder %s23, 7
      %p102 = por %p100, %p101
      %p104 = scmp.ne.s32.totalorder %s89, %s103
      %p105 = scmp.eq.s32.totalorder %s23, 0
      %p106 = por %p104, %p105
      %s108 = sadd.s32 %s107, 1
      %p111 = scmp.eq.s32.totalorder %s17, 7
      %p112 = scmp.ne.s32.totalorder %s107, %s109
      %p113 = scmp.eq.s32.totalorder %s17, 0
      %p114 = por %p112, %p113
      %p115 = scmp.ne.s32.totalorder %s107, %s109
      %p116 = scmp.eq.s32.totalorder %s22, 7
      %p117 = por %p115, %p116
      %p118 = scmp.ne.s32.totalorder %s109, %s110
      %p119 = scmp.eq.s32.totalorder %s22, 0
      %p120 = por %p118, %p119
      %p121 = scmp.ne.s32.totalorder %s109, %s110
      %p122 = scmp.eq.s32.totalorder %s23, 7
      %p123 = por %p121, %p122
      %p125 = scmp.ne.s32.totalorder %s110, %s124
      %p126 = scmp.eq.s32.totalorder %s23, 0
      %p127 = por %p125, %p126
      %s129 = sadd.s32 %s128, 1
      %p132 = scmp.eq.s32.totalorder %s17, 7
      %p133 = scmp.ne.s32.totalorder %s128, %s130
      %p134 = scmp.eq.s32.totalorder %s17, 0
      %p135 = por %p133, %p134
      %p136 = scmp.ne.s32.totalorder %s128, %s130
      %p137 = scmp.eq.s32.totalorder %s22, 7
      %p138 = por %p136, %p137
      %p139 = scmp.ne.s32.totalorder %s130, %s131
      %p140 = scmp.eq.s32.totalorder %s22, 0
      %p141 = por %p139, %p140
      %p142 = scmp.ne.s32.totalorder %s130, %s131
      %p143 = scmp.eq.s32.totalorder %s23, 7
      %p144 = por %p142, %p143
      %p146 = scmp.ne.s32.totalorder %s131, %s145
      %p147 = scmp.eq.s32.totalorder %s23, 0
      %p148 = por %p146, %p147
      %s150 = sadd.s32 %s149, 1
      %p153 = scmp.eq.s32.totalorder %s17, 7
      %p154 = scmp.ne.s32.totalorder %s149, %s151
      %p155 = scmp.eq.s32.totalorder %s17, 0
      %p156 = por %p154, %p155
      %p157 = scmp.ne.s32.totalorder %s149, %s151
      %p158 = scmp.eq.s32.totalorder %s22, 7
      %p159 = por %p157, %p158
      %p160 = scmp.ne.s32.totalorder %s151, %s152
      %p161 = scmp.eq.s32.totalorder %s22, 0
      %p162 = por %p160, %p161
      %p163 = scmp.ne.s32.totalorder %s151, %s152
      %p164 = scmp.eq.s32.totalorder %s23, 7
      %p165 = por %p163, %p164
      %p167 = scmp.ne.s32.totalorder %s152, %s166
      %p168 = scmp.eq.s32.totalorder %s23, 0
      %p169 = por %p167, %p168
      %s171 = sadd.s32 %s170, 1
      %p174 = scmp.eq.s32.totalorder %s17, 7
      %p175 = scmp.ne.s32.totalorder %s170, %s172
      %p176 = scmp.eq.s32.totalorder %s17, 0
      %p177 = por %p175, %p176
      %p178 = scmp.ne.s32.totalorder %s170, %s172
      %p179 = scmp.eq.s32.totalorder %s22, 7
      %p180 = por %p178, %p179
      %p181 = scmp.ne.s32.totalorder %s172, %s173
      %p182 = scmp.eq.s32.totalorder %s22, 0
      %p183 = por %p181, %p182
      %p184 = scmp.ne.s32.totalorder %s172, %s173
      %p185 = scmp.eq.s32.totalorder %s23, 7
      %p186 = por %p184, %p185
      %p188 = scmp.ne.s32.totalorder %s173, %s187
      %p189 = scmp.eq.s32.totalorder %s23, 0
      %p190 = por %p188, %p189
      %s192 = sadd.s32 %s191, 1
      %p195 = scmp.eq.s32.totalorder %s17, 7
      %p196 = scmp.ne.s32.totalorder %s191, %s193
      %p197 = scmp.eq.s32.totalorder %s17, 0
      %p198 = por %p196, %p197
      %p199 = scmp.ne.s32.totalorder %s191, %s193
      %p200 = scmp.eq.s32.totalorder %s22, 7
      %p201 = por %p199, %p200
      %p202 = scmp.ne.s32.totalorder %s193, %s194
      %p203 = scmp.eq.s32.totalorder %s22, 0
      %p204 = por %p202, %p203
      %p205 = scmp.ne.s32.totalorder %s193, %s194
      %p206 = scmp.eq.s32.totalorder %s23, 7
      %p207 = por %p205, %p206
      %p209 = scmp.ne.s32.totalorder %s194, %s208
      %p210 = scmp.eq.s32.totalorder %s23, 0
      %p211 = por %p209, %p210
      %s213 = sadd.s32 %s212, 1
      %p216 = scmp.eq.s32.totalorder %s17, 7
      %p217 = scmp.ne.s32.totalorder %s212, %s214
      %p218 = scmp.eq.s32.totalorder %s17, 0
      %p219 = por %p217, %p218
      %p220 = scmp.ne.s32.totalorder %s212, %s214
      %p221 = scmp.eq.s32.totalorder %s22, 7
      %p222 = por %p220, %p221
      %p223 = scmp.ne.s32.totalorder %s214, %s215
      %p224 = scmp.eq.s32.totalorder %s22, 0
      %p225 = por %p223, %p224
      %p226 = scmp.ne.s32.totalorder %s214, %s215
      %p227 = scmp.eq.s32.totalorder %s23, 7
      %p228 = por %p226, %p227
      %p230 = scmp.ne.s32.totalorder %s215, %s229
      %p231 = scmp.eq.s32.totalorder %s23, 0
      %p232 = por %p230, %p231
      %s234 = sadd.s32 %s233, 1
      %p237 = scmp.eq.s32.totalorder %s17, 7
      %p238 = scmp.ne.s32.totalorder %s233, %s235
      %p239 = scmp.eq.s32.totalorder %s17, 0
      %p240 = por %p238, %p239
      %p241 = scmp.ne.s32.totalorder %s233, %s235
      %p242 = scmp.eq.s32.totalorder %s22, 7
      %p243 = por %p241, %p242
      %p244 = scmp.ne.s32.totalorder %s235, %s236
      %p245 = scmp.eq.s32.totalorder %s22, 0
      %p246 = por %p244, %p245
      %p247 = scmp.ne.s32.totalorder %s235, %s236
      %p248 = scmp.eq.s32.totalorder %s23, 7
      %p249 = por %p247, %p248
      %p251 = scmp.ne.s32.totalorder %s236, %s250
      %p252 = scmp.eq.s32.totalorder %s23, 0
      %p253 = por %p251, %p252
      %s255 = sadd.s32 %s254, 1
      %p258 = scmp.eq.s32.totalorder %s17, 7
      %p259 = scmp.ne.s32.totalorder %s254, %s256
      %p260 = scmp.eq.s32.totalorder %s17, 0
      %p261 = por %p259, %p260
      %p262 = scmp.ne.s32.totalorder %s254, %s256
      %p263 = scmp.eq.s32.totalorder %s22, 7
      %p264 = por %p262, %p263
      %p265 = scmp.ne.s32.totalorder %s256, %s257
      %p266 = scmp.eq.s32.totalorder %s22, 0
      %p267 = por %p265, %p266
      %p268 = scmp.ne.s32.totalorder %s256, %s257
      %p269 = scmp.eq.s32.totalorder %s23, 7
      %p270 = por %p268, %p269
      %p272 = scmp.ne.s32.totalorder %s257, %s271
      %p273 = scmp.eq.s32.totalorder %s23, 0
      %p274 = por %p272, %p273
      %s275 = ssub.s32 %s24, %s36
      %p276 = scmp.eq.s32.totalorder %s275, 0
      %s278 = sadd.s32 %s277, 1
      %s279 = scalar_select %p276, %s277, %s278
      %p282 = pneg %p276
      %p283 = scmp.eq.s32.totalorder %s17, 7
      %p284 = por %p282, %p283
      %p285 = scmp.ne.s32.totalorder %s277, %s280
      %p286 = scmp.eq.s32.totalorder %s17, 0
      %p287 = por %p285, %p286
      %p288 = scmp.ne.s32.totalorder %s277, %s280
      %p289 = scmp.eq.s32.totalorder %s22, 7
      %p290 = por %p288, %p289
      %p291 = scmp.ne.s32.totalorder %s280, %s281
      %p292 = scmp.eq.s32.totalorder %s22, 0
      %p293 = por %p291, %p292
      %p294 = scmp.ne.s32.totalorder %s280, %s281
      %p295 = scmp.eq.s32.totalorder %s23, 7
      %p296 = por %p294, %p295
      %p298 = scmp.ne.s32.totalorder %s281, %s297
      %p299 = scmp.eq.s32.totalorder %s23, 0
      %p300 = por %p298, %p299
      %p301 = scmp.le.s32.totalorder 1, %s17
      %p302 = scmp.lt.s32.totalorder %s17, 9
      %p303 = pnand %p301, %p302
      %p304 = pneg %p303
      // Predicated region
      $region9: #{ssl_mlp_forward.1} parent=5 // pred_check
        _
      $region10: #{ssl_mlp_forward.1} parent=5 // pred_check_branch
        %306 = sbr.rel (%p303) target = $region12
      $region11: #{ssl_mlp_forward.1} parent=5 // pred_region
        %s307 = ssub.s32 %s17, 1
        // Predicated region
        $region13: #{ssl_mlp_forward.1} parent=11 // pred_check
          %p308 = pneg %p78
        $region14: #{ssl_mlp_forward.1} parent=11 // pred_check_branch
          %310 = sbr.rel (%p308) target = $region16
        $region15: #{ssl_mlp_forward.1} parent=11 // pred_region
          _
        $region16: #{ssl_mlp_forward.1} parent=11 // pred_fallthru
          _
        // Predicated region
        $region17: #{ssl_mlp_forward.1} parent=11 // pred_check
          %p311 = pneg %p99
        $region18: #{ssl_mlp_forward.1} parent=11 // pred_check_branch
          %313 = sbr.rel (%p311) target = $region20
        $region19: #{ssl_mlp_forward.1} parent=11 // pred_region
          _
        $region20: #{ssl_mlp_forward.1} parent=11 // pred_fallthru
          _
        // Predicated region
        $region21: #{ssl_mlp_forward.1} parent=11 // pred_check
          %p314 = pneg %p120
        $region22: #{ssl_mlp_forward.1} parent=11 // pred_check_branch
          %316 = sbr.rel (%p314) target = $region24
        $region23: #{ssl_mlp_forward.1} parent=11 // pred_region
          _
        $region24: #{ssl_mlp_forward.1} parent=11 // pred_fallthru
          _
        // Predicated region
        $region25: #{ssl_mlp_forward.1} parent=11 // pred_check
          %p317 = pneg %p141
        $region26: #{ssl_mlp_forward.1} parent=11 // pred_check_branch
          %319 = sbr.rel (%p317) target = $region28
        $region27: #{ssl_mlp_forward.1} parent=11 // pred_region
          _
        $region28: #{ssl_mlp_forward.1} parent=11 // pred_fallthru
          _
        // Predicated region
        $region29: #{ssl_mlp_forward.1} parent=11 // pred_check
          %p320 = pneg %p162
        $region30: #{ssl_mlp_forward.1} parent=11 // pred_check_branch
          %322 = sbr.rel (%p320) target = $region32
        $region31: #{ssl_mlp_forward.1} parent=11 // pred_region
          _
        $region32: #{ssl_mlp_forward.1} parent=11 // pred_fallthru
          _
        // Predicated region
        $region33: #{ssl_mlp_forward.1} parent=11 // pred_check
          %p323 = pneg %p183
        $region34: #{ssl_mlp_forward.1} parent=11 // pred_check_branch
          %325 = sbr.rel (%p323) target = $region36
        $region35: #{ssl_mlp_forward.1} parent=11 // pred_region
          _
        $region36: #{ssl_mlp_forward.1} parent=11 // pred_fallthru
          _
        // Predicated region
        $region37: #{ssl_mlp_forward.1} parent=11 // pred_check
          %p326 = pneg %p204
        $region38: #{ssl_mlp_forward.1} parent=11 // pred_check_branch
          %328 = sbr.rel (%p326) target = $region40
        $region39: #{ssl_mlp_forward.1} parent=11 // pred_region
          _
        $region40: #{ssl_mlp_forward.1} parent=11 // pred_fallthru
          _
        // Predicated region
        $region41: #{ssl_mlp_forward.1} parent=11 // pred_check
          %p329 = pneg %p225
        $region42: #{ssl_mlp_forward.1} parent=11 // pred_check_branch
          %331 = sbr.rel (%p329) target = $region44
        $region43: #{ssl_mlp_forward.1} parent=11 // pred_region
          _
        $region44: #{ssl_mlp_forward.1} parent=11 // pred_fallthru
          _
        // Predicated region
        $region45: #{ssl_mlp_forward.1} parent=11 // pred_check
          %p332 = pneg %p246
        $region46: #{ssl_mlp_forward.1} parent=11 // pred_check_branch
          %334 = sbr.rel (%p332) target = $region48
        $region47: #{ssl_mlp_forward.1} parent=11 // pred_region
          _
        $region48: #{ssl_mlp_forward.1} parent=11 // pred_fallthru
          _
        // Predicated region
        $region49: #{ssl_mlp_forward.1} parent=11 // pred_check
          %p335 = pneg %p267
        $region50: #{ssl_mlp_forward.1} parent=11 // pred_check_branch
          %337 = sbr.rel (%p335) target = $region52
        $region51: #{ssl_mlp_forward.1} parent=11 // pred_region
          _
        $region52: #{ssl_mlp_forward.1} parent=11 // pred_fallthru
          _
      $region12: #{ssl_mlp_forward.1} parent=5 // pred_fallthru
        _
      %p338 = scmp.lt.s32.totalorder %s17, 8
      // Predicated region
      $region53: #{ssl_mlp_forward.1} parent=5 // pred_check
        %p339 = pneg %p338
      $region54: #{ssl_mlp_forward.1} parent=5 // pred_check_branch
        %341 = sbr.rel (%p339) target = $region56
      $region55: #{ssl_mlp_forward.1} parent=5 // pred_region
        // Predicated region
        $region57: #{ssl_mlp_forward.1} parent=55 // pred_check
          %p342 = pneg %p51
        $region58: #{ssl_mlp_forward.1} parent=55 // pred_check_branch
          %344 = sbr.rel (%p342) target = $region60
        $region59: #{ssl_mlp_forward.1} parent=55 // pred_region
          %s345 = sand.u32 %s41, 1
          %s346 = sand.u32 %s41, 1
          %s347 = smul.addr %s346, 64
          %s348 = scalar_lea.vmem [#allocation3], %s347
          %s349 = smul.u32 8, %s24
          %s350 = smul.u32 2, %s25
          %s351 = ssub.s32 7, %s350
          %p352 = scmp.lt.s32.totalorder %s351, 2
          %s353 = scalar_select %p352, %s351, 2
          %s354 = smul.u32 512, %s353
          %p355 = scmp.ne.s32.totalorder 0, %s354
          %s356 = smul.addr %s349, 7
          %s357 = sadd.s32 %s350, %s356
          %s358 = smul.addr %s357, 4
          %s359 = scalar_lea.vmem %s0, %s358
          // Predicated region
          $region61: #{ssl_mlp_forward.1} parent=59 // pred_check
            %p360 = pneg %p355
          $region62: #{ssl_mlp_forward.1} parent=59 // pred_check_branch
            %362 = sbr.rel (%p360) target = $region64
          $region63: #{ssl_mlp_forward.1} parent=59 // pred_region
            // Predicated region
            $region65: #{ssl_mlp_forward.1} parent=63 // pred_check
              _
            $region66: #{ssl_mlp_forward.1} parent=63 // pred_check_branch
              %364 = sbr.rel target = $region68
            $region67: #{ssl_mlp_forward.1} parent=63 // pred_region
              // Predicated region
              $region87: #{ssl_mlp_forward.1} parent=67 // pred_check
                _
              $region88: #{ssl_mlp_forward.1} parent=67 // pred_check_branch
                %458 = sbr.rel (0) target = $region90
              $region89: #{ssl_mlp_forward.1} parent=67 // pred_region
                %s459 = sshrl.u32 %s353, 1
                // While loop
                $region91: #{ssl_mlp_forward.1} parent=89 // loop_pre_header
                  _
                $region92: #{ssl_mlp_forward.1} parent=89 // loop_header
                  %s461 = sphi 0, %s463
                  %p462 = scmp.ge.s32.totalorder %s461, %s459
                  %s466 = sphi 0, %s471
                  %s467 = sphi %s359, %s474
                  %s468 = sphi %s348, %s475
                $region93: #{ssl_mlp_forward.1} parent=89 // loop_header_branch
                  %465 = sbr.rel (%p462) target = $region97
                $region94: #{ssl_mlp_forward.1} parent=89 // loop_body
                  %s469 = sadd.s32 1, %s466
                  %p470 = scmp.ge.s32.totalorder %s469, %s459
                  %s471 = scalar_select %p470, 0, %s469
                  %s472 = smul.u32 %s471, 8
                  %s473 = smul.u32 %s471, 8
                  %s474 = scalar_lea.vmem %s359, %s472
                  %s475 = scalar_lea.vmem %s348, %s473 [#allocation3]
                $region95: #{ssl_mlp_forward.1} parent=89 // loop_footer
                  %s463 = sadd.s32 %s461, 1
                $region96: #{ssl_mlp_forward.1} parent=89 // loop_footer_branch
                  %460 = sbr.rel target = $region92
                $region97: #{ssl_mlp_forward.1} parent=89 // loop_exit
                  _
                %s476 = sshrl.u32 %s353, 1
                %s477 = sand.u32 %s353, 1
                %s478 = smul.u32 %s476, 2
                %s479 = smul.u32 4, %s478
                %s480 = scalar_lea.vmem %s359, %s479
                %s481 = smul.u32 4, %s478
                %s482 = scalar_lea.vmem %s348, %s481 [#allocation3]
                // While loop
                $region98: #{ssl_mlp_forward.1} parent=89 // loop_pre_header
                  _
                $region99: #{ssl_mlp_forward.1} parent=89 // loop_header
                  %s484 = sphi 0, %s486
                  %p485 = scmp.ge.s32.totalorder %s484, %s477
                  %s489 = sphi 0, %s494
                  %s490 = sphi %s480, %s497
                  %s491 = sphi %s482, %s498
                $region100: #{ssl_mlp_forward.1} parent=89 // loop_header_branch
                  %488 = sbr.rel (%p485) target = $region104
                $region101: #{ssl_mlp_forward.1} parent=89 // loop_body
                  %s492 = sadd.s32 1, %s489
                  %p493 = scmp.ge.s32.totalorder %s492, %s477
                  %s494 = scalar_select %p493, 0, %s492
                  %s495 = smul.u32 %s494, 4
                  %s496 = smul.u32 %s494, 4
                  %s497 = scalar_lea.vmem %s480, %s495
                  %s498 = scalar_lea.vmem %s482, %s496 [#allocation3]
                $region102: #{ssl_mlp_forward.1} parent=89 // loop_footer
                  %s486 = sadd.s32 %s484, 1
                $region103: #{ssl_mlp_forward.1} parent=89 // loop_footer_branch
                  %483 = sbr.rel target = $region99
                $region104: #{ssl_mlp_forward.1} parent=89 // loop_exit
                  _
                %s500 = ssub.s32 16, 1
                %s501 = sshrl.u32 %s353, 1
                // While loop
                $region105: #{ssl_mlp_forward.1} parent=89 // loop_pre_header
                  _
                $region106: #{ssl_mlp_forward.1} parent=89 // loop_header
                  %s503 = sphi 0, %s505
                  %p504 = scmp.ge.s32.totalorder %s503, %s501
                  %s508 = sphi 0, %s545
                  %s509 = sphi %s359, %s548
                  %s510 = sphi %s348, %s549
                $region107: #{ssl_mlp_forward.1} parent=89 // loop_header_branch
                  %507 = sbr.rel (%p504) target = $region111
                $region108: #{ssl_mlp_forward.1} parent=89 // loop_body
                  %v511 = vld [vmem:[%s509] sm:%s500]
                  %512 = vst [vmem:[%s510] sm:%s500] %v511
                  %v513 = vld [vmem:[%s509 + $0x4] sm:%s500]
                  %514 = vst [vmem:[%s510 + $0x4] sm:%s500] %v513
                  %v515 = vld [vmem:[%s509 + $0x1c] sm:%s500]
                  %516 = vst [vmem:[%s510 + $0x8] sm:%s500] %v515
                  %v517 = vld [vmem:[%s509 + $0x20] sm:%s500]
                  %518 = vst [vmem:[%s510 + $0xc] sm:%s500] %v517
                  %v519 = vld [vmem:[%s509 + $0x38] sm:%s500]
                  %520 = vst [vmem:[%s510 + $0x10] sm:%s500] %v519
                  %v521 = vld [vmem:[%s509 + $0x3c] sm:%s500]
                  %522 = vst [vmem:[%s510 + $0x14] sm:%s500] %v521
                  %v523 = vld [vmem:[%s509 + $0x54] sm:%s500]
                  %524 = vst [vmem:[%s510 + $0x18] sm:%s500] %v523
                  %v525 = vld [vmem:[%s509 + $0x58] sm:%s500]
                  %526 = vst [vmem:[%s510 + $0x1c] sm:%s500] %v525
                  %v527 = vld [vmem:[%s509 + $0x70] sm:%s500]
                  %528 = vst [vmem:[%s510 + $0x20] sm:%s500] %v527
                  %v529 = vld [vmem:[%s509 + $0x74] sm:%s500]
                  %530 = vst [vmem:[%s510 + $0x24] sm:%s500] %v529
                  %v531 = vld [vmem:[%s509 + $0x8c] sm:%s500]
                  %532 = vst [vmem:[%s510 + $0x28] sm:%s500] %v531
                  %v533 = vld [vmem:[%s509 + $0x90] sm:%s500]
                  %534 = vst [vmem:[%s510 + $0x2c] sm:%s500] %v533
                  %v535 = vld [vmem:[%s509 + $0xa8] sm:%s500]
                  %536 = vst [vmem:[%s510 + $0x30] sm:%s500] %v535
                  %v537 = vld [vmem:[%s509 + $0xac] sm:%s500]
                  %538 = vst [vmem:[%s510 + $0x34] sm:%s500] %v537
                  %v539 = vld [vmem:[%s509 + $0xc4] sm:%s500]
                  %540 = vst [vmem:[%s510 + $0x38] sm:%s500] %v539
                  %v541 = vld [vmem:[%s509 + $0xc8] sm:%s500]
                  %542 = vst [vmem:[%s510 + $0x3c] sm:%s500] %v541
                  %s543 = sadd.s32 1, %s508
                  %p544 = scmp.ge.s32.totalorder %s543, %s501
                  %s545 = scalar_select %p544, 0, %s543
                  %s546 = smul.u32 %s545, 8
                  %s547 = smul.u32 %s545, 8
                  %s548 = scalar_lea.vmem %s359, %s546
                  %s549 = scalar_lea.vmem %s348, %s547 [#allocation3]
                $region109: #{ssl_mlp_forward.1} parent=89 // loop_footer
                  %s505 = sadd.s32 %s503, 1
                $region110: #{ssl_mlp_forward.1} parent=89 // loop_footer_branch
                  %502 = sbr.rel target = $region106
                $region111: #{ssl_mlp_forward.1} parent=89 // loop_exit
                  _
                %s550 = sshrl.u32 %s353, 1
                %s551 = sand.u32 %s353, 1
                %s552 = smul.u32 %s550, 2
                %s553 = smul.u32 4, %s552
                %s554 = scalar_lea.vmem %s359, %s553
                %s555 = smul.u32 4, %s552
                %s556 = scalar_lea.vmem %s348, %s555 [#allocation3]
                // While loop
                $region112: #{ssl_mlp_forward.1} parent=89 // loop_pre_header
                  _
                $region113: #{ssl_mlp_forward.1} parent=89 // loop_header
                  %s558 = sphi 0, %s560
                  %p559 = scmp.ge.s32.totalorder %s558, %s551
                  %s563 = sphi 0, %s584
                  %s564 = sphi %s554, %s587
                  %s565 = sphi %s556, %s588
                $region114: #{ssl_mlp_forward.1} parent=89 // loop_header_branch
                  %562 = sbr.rel (%p559) target = $region118
                $region115: #{ssl_mlp_forward.1} parent=89 // loop_body
                  %v566 = vld [vmem:[%s564] sm:%s500]
                  %567 = vst [vmem:[%s565] sm:%s500] %v566
                  %v568 = vld [vmem:[%s564 + $0x1c] sm:%s500]
                  %569 = vst [vmem:[%s565 + $0x8] sm:%s500] %v568
                  %v570 = vld [vmem:[%s564 + $0x38] sm:%s500]
                  %571 = vst [vmem:[%s565 + $0x10] sm:%s500] %v570
                  %v572 = vld [vmem:[%s564 + $0x54] sm:%s500]
                  %573 = vst [vmem:[%s565 + $0x18] sm:%s500] %v572
                  %v574 = vld [vmem:[%s564 + $0x70] sm:%s500]
                  %575 = vst [vmem:[%s565 + $0x20] sm:%s500] %v574
                  %v576 = vld [vmem:[%s564 + $0x8c] sm:%s500]
                  %577 = vst [vmem:[%s565 + $0x28] sm:%s500] %v576
                  %v578 = vld [vmem:[%s564 + $0xa8] sm:%s500]
                  %579 = vst [vmem:[%s565 + $0x30] sm:%s500] %v578
                  %v580 = vld [vmem:[%s564 + $0xc4] sm:%s500]
                  %581 = vst [vmem:[%s565 + $0x38] sm:%s500] %v580
                  %s582 = sadd.s32 1, %s563
                  %p583 = scmp.ge.s32.totalorder %s582, %s551
                  %s584 = scalar_select %p583, 0, %s582
                  %s585 = smul.u32 %s584, 4
                  %s586 = smul.u32 %s584, 4
                  %s587 = scalar_lea.vmem %s554, %s585
                  %s588 = scalar_lea.vmem %s556, %s586 [#allocation3]
                $region116: #{ssl_mlp_forward.1} parent=89 // loop_footer
                  %s560 = sadd.s32 %s558, 1
                $region117: #{ssl_mlp_forward.1} parent=89 // loop_footer_branch
                  %557 = sbr.rel target = $region113
                $region118: #{ssl_mlp_forward.1} parent=89 // loop_exit
                  _
              $region90: #{ssl_mlp_forward.1} parent=67 // pred_fallthru
                _
            $region68: #{ssl_mlp_forward.1} parent=63 // pred_fallthru
              _
            // Predicated region
            $region69: #{ssl_mlp_forward.1} parent=63 // pred_check
              _
            $region70: #{ssl_mlp_forward.1} parent=63 // pred_check_branch
              %366 = sbr.rel (0) target = $region72
            $region71: #{ssl_mlp_forward.1} parent=63 // pred_region
              %s368 = ssub.s32 16, 1
              %s369 = sshrl.u32 %s353, 1
              // While loop
              $region73: #{ssl_mlp_forward.1} parent=71 // loop_pre_header
                _
              $region74: #{ssl_mlp_forward.1} parent=71 // loop_header
                %s371 = sphi 0, %s373
                %p372 = scmp.ge.s32.totalorder %s371, %s369
                %s376 = sphi 0, %s413
                %s377 = sphi %s359, %s416
                %s378 = sphi %s348, %s417
              $region75: #{ssl_mlp_forward.1} parent=71 // loop_header_branch
                %375 = sbr.rel (%p372) target = $region79
              $region76: #{ssl_mlp_forward.1} parent=71 // loop_body
                %v379 = vld [vmem:[%s377] sm:%s368]
                %380 = vst [vmem:[%s378] sm:%s368] %v379
                %v381 = vld [vmem:[%s377 + $0x4] sm:%s368]
                %382 = vst [vmem:[%s378 + $0x4] sm:%s368] %v381
                %v383 = vld [vmem:[%s377 + $0x1c] sm:%s368]
                %384 = vst [vmem:[%s378 + $0x8] sm:%s368] %v383
                %v385 = vld [vmem:[%s377 + $0x20] sm:%s368]
                %386 = vst [vmem:[%s378 + $0xc] sm:%s368] %v385
                %v387 = vld [vmem:[%s377 + $0x38] sm:%s368]
                %388 = vst [vmem:[%s378 + $0x10] sm:%s368] %v387
                %v389 = vld [vmem:[%s377 + $0x3c] sm:%s368]
                %390 = vst [vmem:[%s378 + $0x14] sm:%s368] %v389
                %v391 = vld [vmem:[%s377 + $0x54] sm:%s368]
                %392 = vst [vmem:[%s378 + $0x18] sm:%s368] %v391
                %v393 = vld [vmem:[%s377 + $0x58] sm:%s368]
                %394 = vst [vmem:[%s378 + $0x1c] sm:%s368] %v393
                %v395 = vld [vmem:[%s377 + $0x70] sm:%s368]
                %396 = vst [vmem:[%s378 + $0x20] sm:%s368] %v395
                %v397 = vld [vmem:[%s377 + $0x74] sm:%s368]
                %398 = vst [vmem:[%s378 + $0x24] sm:%s368] %v397
                %v399 = vld [vmem:[%s377 + $0x8c] sm:%s368]
                %400 = vst [vmem:[%s378 + $0x28] sm:%s368] %v399
                %v401 = vld [vmem:[%s377 + $0x90] sm:%s368]
                %402 = vst [vmem:[%s378 + $0x2c] sm:%s368] %v401
                %v403 = vld [vmem:[%s377 + $0xa8] sm:%s368]
                %404 = vst [vmem:[%s378 + $0x30] sm:%s368] %v403
                %v405 = vld [vmem:[%s377 + $0xac] sm:%s368]
                %406 = vst [vmem:[%s378 + $0x34] sm:%s368] %v405
                %v407 = vld [vmem:[%s377 + $0xc4] sm:%s368]
                %408 = vst [vmem:[%s378 + $0x38] sm:%s368] %v407
                %v409 = vld [vmem:[%s377 + $0xc8] sm:%s368]
                %410 = vst [vmem:[%s378 + $0x3c] sm:%s368] %v409
                %s411 = sadd.s32 1, %s376
                %p412 = scmp.ge.s32.totalorder %s411, %s369
                %s413 = scalar_select %p412, 0, %s411
                %s414 = smul.u32 %s413, 8
                %s415 = smul.u32 %s413, 8
                %s416 = scalar_lea.vmem %s359, %s414
                %s417 = scalar_lea.vmem %s348, %s415 [#allocation3]
              $region77: #{ssl_mlp_forward.1} parent=71 // loop_footer
                %s373 = sadd.s32 %s371, 1
              $region78: #{ssl_mlp_forward.1} parent=71 // loop_footer_branch
                %370 = sbr.rel target = $region74
              $region79: #{ssl_mlp_forward.1} parent=71 // loop_exit
                _
              %s418 = sshrl.u32 %s353, 1
              %s419 = sand.u32 %s353, 1
              %s420 = smul.u32 %s418, 2
              %s421 = smul.u32 4, %s420
              %s422 = scalar_lea.vmem %s359, %s421
              %s423 = smul.u32 4, %s420
              %s424 = scalar_lea.vmem %s348, %s423 [#allocation3]
              // While loop
              $region80: #{ssl_mlp_forward.1} parent=71 // loop_pre_header
                _
              $region81: #{ssl_mlp_forward.1} parent=71 // loop_header
                %s426 = sphi 0, %s428
                %p427 = scmp.ge.s32.totalorder %s426, %s419
                %s431 = sphi 0, %s452
                %s432 = sphi %s422, %s455
                %s433 = sphi %s424, %s456
              $region82: #{ssl_mlp_forward.1} parent=71 // loop_header_branch
                %430 = sbr.rel (%p427) target = $region86
              $region83: #{ssl_mlp_forward.1} parent=71 // loop_body
                %v434 = vld [vmem:[%s432] sm:%s368]
                %435 = vst [vmem:[%s433] sm:%s368] %v434
                %v436 = vld [vmem:[%s432 + $0x1c] sm:%s368]
                %437 = vst [vmem:[%s433 + $0x8] sm:%s368] %v436
                %v438 = vld [vmem:[%s432 + $0x38] sm:%s368]
                %439 = vst [vmem:[%s433 + $0x10] sm:%s368] %v438
                %v440 = vld [vmem:[%s432 + $0x54] sm:%s368]
                %441 = vst [vmem:[%s433 + $0x18] sm:%s368] %v440
                %v442 = vld [vmem:[%s432 + $0x70] sm:%s368]
                %443 = vst [vmem:[%s433 + $0x20] sm:%s368] %v442
                %v444 = vld [vmem:[%s432 + $0x8c] sm:%s368]
                %445 = vst [vmem:[%s433 + $0x28] sm:%s368] %v444
                %v446 = vld [vmem:[%s432 + $0xa8] sm:%s368]
                %447 = vst [vmem:[%s433 + $0x30] sm:%s368] %v446
                %v448 = vld [vmem:[%s432 + $0xc4] sm:%s368]
                %449 = vst [vmem:[%s433 + $0x38] sm:%s368] %v448
                %s450 = sadd.s32 1, %s431
                %p451 = scmp.ge.s32.totalorder %s450, %s419
                %s452 = scalar_select %p451, 0, %s450
                %s453 = smul.u32 %s452, 4
                %s454 = smul.u32 %s452, 4
                %s455 = scalar_lea.vmem %s422, %s453
                %s456 = scalar_lea.vmem %s424, %s454 [#allocation3]
              $region84: #{ssl_mlp_forward.1} parent=71 // loop_footer
                %s428 = sadd.s32 %s426, 1
              $region85: #{ssl_mlp_forward.1} parent=71 // loop_footer_branch
                %425 = sbr.rel target = $region81
              $region86: #{ssl_mlp_forward.1} parent=71 // loop_exit
                _
            $region72: #{ssl_mlp_forward.1} parent=63 // pred_fallthru
              _
          $region64: #{ssl_mlp_forward.1} parent=59 // pred_fallthru
            _
          %589 = vnop
        $region60: #{ssl_mlp_forward.1} parent=55 // pred_fallthru
          _
      $region56: #{ssl_mlp_forward.1} parent=5 // pred_fallthru
        _
      %p590 = scmp.le.s32.totalorder 1, %s17
      %p591 = scmp.lt.s32.totalorder %s17, 9
      %p592 = pnand %p590, %p591
      %p593 = pneg %p592
      // Predicated region
      $region119: #{ssl_mlp_forward.1} parent=5 // pred_check
        _
      $region120: #{ssl_mlp_forward.1} parent=5 // pred_check_branch
        %595 = sbr.rel (%p592) target = $region122
      $region121: #{ssl_mlp_forward.1} parent=5 // pred_region
        %s596 = ssub.s32 %s17, 1
        %s597 = sand.u32 %s44, 1
        %s598 = sand.u32 %s44, 1
        %s599 = smul.addr %s598, 64
        %s600 = scalar_lea.vmem [#allocation3], %s599
        // Predicated region
        $region123: #{ssl_mlp_forward.1} parent=121 // pred_check
          %p601 = pneg %p57
        $region124: #{ssl_mlp_forward.1} parent=121 // pred_check_branch
          %603 = sbr.rel (%p601) target = $region126
        $region125: #{ssl_mlp_forward.1} parent=121 // pred_region
          _
        $region126: #{ssl_mlp_forward.1} parent=121 // pred_fallthru
          _
        %s604 = sand.u32 %s44, 1
        %s605 = sand.u32 %s44, 1
        %s606 = smul.addr %s605, 64
        %s607 = scalar_lea.vmem [#allocation3], %s606
        %p608 = pneg %p57
        %p609 = pneg %p54
        %p610 = pneg %p78
        %p611 = pneg %p75
        %p612 = pneg %p99
        %p613 = pneg %p96
        %p614 = pneg %p120
        %p615 = pneg %p117
        %p616 = pneg %p141
        %p617 = pneg %p138
        %p618 = pneg %p162
        %p619 = pneg %p159
        %p620 = pneg %p183
        %p621 = pneg %p180
        %p622 = pneg %p204
        %p623 = pneg %p201
        %p624 = pneg %p225
        %p625 = pneg %p222
        %p626 = pneg %p246
        %p627 = pneg %p243
        %p628 = pneg %p267
        %p629 = pneg %p264
        %p630 = pneg %p293
        %p631 = pneg %p290
        %p632 = scmp.lt.s32.totalorder %s26, 1
        %s633 = scalar_select %p632, %s26, 1
        %s634 = smul.addr %s633, 8
        %s635 = scalar_lea.vmem %s11, %s634
        %s636 = smul.u32 8, %s26
        %s637 = smul.u32 2, %s27
        %s638 = ssub.s32 7, %s637
        %p639 = scmp.lt.s32.totalorder %s638, 2
        %s640 = scalar_select %p639, %s638, 2
        %s641 = smul.u32 512, %s640
        %p642 = scmp.lt.s32.totalorder %s26, 1
        %s643 = scalar_select %p642, %s26, 1
        %s644 = smul.addr %s643, 8
        %s645 = scalar_lea.vmem %s11, %s644
        %p647 = scmp.eq.s32.totalorder %s27, 0
        // Predicated region
        $region127: #{ssl_mlp_forward.1} parent=121 // pred_check
          %p648 = pneg %p647
        $region128: #{ssl_mlp_forward.1} parent=121 // pred_check_branch
          %650 = sbr.rel (%p648) target = $region130
        $region129: #{ssl_mlp_forward.1} parent=121 // pred_region
          %vm651 = vcmask 523264
          %652 = vst.msk [vmem:[#allocation2] sm:$0xff] %vm651, 0.0
        $region130: #{ssl_mlp_forward.1} parent=121 // pred_fallthru
          _
        %v653 = vld [vmem:[%s600] sm:$0xf]
        %v654 = vld [vmem:[%s600 + $0x4] sm:$0xf]
        %v655 = vld [vmem:[%s600 + $0x8] sm:$0xf]
        %v656 = vld [vmem:[%s600 + $0xc] sm:$0xf]
        %v657 = vld [vmem:[%s600 + $0x10] sm:$0xf]
        %v658 = vld [vmem:[%s600 + $0x14] sm:$0xf]
        %v659 = vld [vmem:[%s600 + $0x18] sm:$0xf]
        %v660 = vld [vmem:[%s600 + $0x1c] sm:$0xf]
        %v661 = vld [vmem:[%s600 + $0x20] sm:$0xf]
        %v662 = vld [vmem:[%s600 + $0x24] sm:$0xf]
        %v663 = vld [vmem:[%s600 + $0x28] sm:$0xf]
        %v664 = vld [vmem:[%s600 + $0x2c] sm:$0xf]
        %v665 = vld [vmem:[%s600 + $0x30] sm:$0xf]
        %v666 = vld [vmem:[%s600 + $0x34] sm:$0xf]
        %v667 = vld [vmem:[%s600 + $0x38] sm:$0xf]
        %v668 = vld [vmem:[%s600 + $0x3c] sm:$0xf]
        %s669 = smul.u32 %s27, 16
        %s670 = ssub.s32 50, %s669
        %v671 = vlaneseq
        %v672 = vshrl.u32 %v671, 7
        %v673 = vadd.s32 %v672, 8
        %v674 = vstv %s670
        %vm675 = vcmp.lt.s32.totalorder %v672, %v674
        %vm676 = vcmp.lt.s32.totalorder %v673, %v674
        %v677 = vsel %vm675, 1, 0
        %v678 = vsel %vm676, 1, 0
        %vm679 = vcmp.eq.s32.totalorder %v677, 1
        %vm680 = vcmp.eq.s32.totalorder %v678, 1
        %vm681 = vmpackc.low %vm679, %vm679
        %vm682 = vmpackc.low %vm680, %vm680
        %v683 = vsel %vm681, %v653, 0
        %v684 = vsel %vm682, %v654, 0
        %v685 = vsel %vm681, %v655, 0
        %v686 = vsel %vm682, %v656, 0
        %v687 = vsel %vm681, %v657, 0
        %v688 = vsel %vm682, %v658, 0
        %v689 = vsel %vm681, %v659, 0
        %v690 = vsel %vm682, %v660, 0
        %v691 = vsel %vm681, %v661, 0
        %v692 = vsel %vm682, %v662, 0
        %v693 = vsel %vm681, %v663, 0
        %v694 = vsel %vm682, %v664, 0
        %v695 = vsel %vm681, %v665, 0
        %v696 = vsel %vm682, %v666, 0
        %v697 = vsel %vm681, %v667, 0
        %v698 = vsel %vm682, %v668, 0
        %v699 = vld [vmem:[#allocation2] sm:$0xff]
        %v700 = vunpack.c.l.bf16 %v683
        %v701 = vunpack.c.l.bf16 %v684
        %v702 = vunpack.c.l.bf16 %v685
        %v703 = vunpack.c.l.bf16 %v686
        %v704 = vunpack.c.l.bf16 %v687
        %v705 = vunpack.c.l.bf16 %v688
        %v706 = vunpack.c.l.bf16 %v689
        %v707 = vunpack.c.l.bf16 %v690
        %v708 = vunpack.c.l.bf16 %v691
        %v709 = vunpack.c.l.bf16 %v692
        %v710 = vunpack.c.l.bf16 %v693
        %v711 = vunpack.c.l.bf16 %v694
        %v712 = vunpack.c.l.bf16 %v695
        %v713 = vunpack.c.l.bf16 %v696
        %v714 = vunpack.c.l.bf16 %v697
        %v715 = vunpack.c.l.bf16 %v698
        %vm716 = vcmask 523264
        %v717 = vsel %vm716, %v700, 0.0
        %v718 = vsel %vm716, %v701, 0.0
        %v719 = vadd.f32 %v717, %v718
        %v720 = vrot.slane %v719, 4
        %v721 = vadd.f32 %v719, %v720
        %v722 = vrot.slane %v721, 2
        %v723 = vadd.f32 %v721, %v722
        %v724 = vrot.slane %v723, 1
        %v725 = vadd.f32 %v723, %v724
        %v726 = vsel %vm716, %v702, 0.0
        %v727 = vsel %vm716, %v703, 0.0
        %v728 = vadd.f32 %v726, %v727
        %v729 = vrot.slane %v728, 4
        %v730 = vadd.f32 %v728, %v729
        %v731 = vrot.slane %v730, 2
        %v732 = vadd.f32 %v730, %v731
        %v733 = vrot.slane %v732, 1
        %v734 = vadd.f32 %v732, %v733
        %v735 = vsel %vm716, %v704, 0.0
        %v736 = vsel %vm716, %v705, 0.0
        %v737 = vadd.f32 %v735, %v736
        %v738 = vrot.slane %v737, 4
        %v739 = vadd.f32 %v737, %v738
        %v740 = vrot.slane %v739, 2
        %v741 = vadd.f32 %v739, %v740
        %v742 = vrot.slane %v741, 1
        %v743 = vadd.f32 %v741, %v742
        %v744 = vsel %vm716, %v706, 0.0
        %v745 = vsel %vm716, %v707, 0.0
        %v746 = vadd.f32 %v744, %v745
        %v747 = vrot.slane %v746, 4
        %v748 = vadd.f32 %v746, %v747
        %v749 = vrot.slane %v748, 2
        %v750 = vadd.f32 %v748, %v749
        %v751 = vrot.slane %v750, 1
        %v752 = vadd.f32 %v750, %v751
        %v753 = vsel %vm716, %v708, 0.0
        %v754 = vsel %vm716, %v709, 0.0
        %v755 = vadd.f32 %v753, %v754
        %v756 = vrot.slane %v755, 4
        %v757 = vadd.f32 %v755, %v756
        %v758 = vrot.slane %v757, 2
        %v759 = vadd.f32 %v757, %v758
        %v760 = vrot.slane %v759, 1
        %v761 = vadd.f32 %v759, %v760
        %v762 = vsel %vm716, %v710, 0.0
        %v763 = vsel %vm716, %v711, 0.0
        %v764 = vadd.f32 %v762, %v763
        %v765 = vrot.slane %v764, 4
        %v766 = vadd.f32 %v764, %v765
        %v767 = vrot.slane %v766, 2
        %v768 = vadd.f32 %v766, %v767
        %v769 = vrot.slane %v768, 1
        %v770 = vadd.f32 %v768, %v769
        %v771 = vsel %vm716, %v712, 0.0
        %v772 = vsel %vm716, %v713, 0.0
        %v773 = vadd.f32 %v771, %v772
        %v774 = vrot.slane %v773, 4
        %v775 = vadd.f32 %v773, %v774
        %v776 = vrot.slane %v775, 2
        %v777 = vadd.f32 %v775, %v776
        %v778 = vrot.slane %v777, 1
        %v779 = vadd.f32 %v777, %v778
        %v780 = vsel %vm716, %v714, 0.0
        %v781 = vsel %vm716, %v715, 0.0
        %v782 = vadd.f32 %v780, %v781
        %v783 = vrot.slane %v782, 4
        %v784 = vadd.f32 %v782, %v783
        %v785 = vrot.slane %v784, 2
        %v786 = vadd.f32 %v784, %v785
        %v787 = vrot.slane %v786, 1
        %v788 = vadd.f32 %v786, %v787
        %vm797 = vcmask 1041409
        %v798 = vsel %vm797, %v734, %v725
        %vm799 = vcmask 1042434
        %v800 = vsel %vm799, %v743, %v798
        %vm801 = vcmask 1043459
        %v802 = vsel %vm801, %v752, %v800
        %vm803 = vcmask 1044484
        %v804 = vsel %vm803, %v761, %v802
        %vm805 = vcmask 1045509
        %v806 = vsel %vm805, %v770, %v804
        %vm807 = vcmask 1046534
        %v808 = vsel %vm807, %v779, %v806
        %vm809 = vcmask 1047559
        %v810 = vsel %vm809, %v788, %v808
        %v812 = vadd.f32 %v699, %v810
        %813 = vst.msk [vmem:[#allocation2] sm:$0xff] %vm716, %v812
        %p814 = scmp.eq.s32.totalorder %s27, 3
        // Predicated region
        $region131: #{ssl_mlp_forward.1} parent=121 // pred_check
          %p815 = pneg %p814
        $region132: #{ssl_mlp_forward.1} parent=121 // pred_check_branch
          %817 = sbr.rel (%p815) target = $region134
        $region133: #{ssl_mlp_forward.1} parent=121 // pred_region
          %v818 = vld [vmem:[%s1] sm:$0xf]
          %v819 = vld [vmem:[%s1 + $0x4] sm:$0xf]
          %v820 = vld [vmem:[%s1 + $0x8] sm:$0xf]
          %v821 = vld [vmem:[%s1 + $0xc] sm:$0xf]
          %v822 = vld [vmem:[%s1 + $0x10] sm:$0xf]
          %v823 = vld [vmem:[%s1 + $0x14] sm:$0xf]
          %v824 = vld [vmem:[%s1 + $0x18] sm:$0xf]
          %v825 = vld [vmem:[%s1 + $0x1c] sm:$0xf]
          %v826 = vld [vmem:[%s5] sm:$0xf]
          %v827 = vld [vmem:[%s5 + $0x4] sm:$0xf]
          %v828 = vld [vmem:[%s5 + $0x8] sm:$0xf]
          %v829 = vld [vmem:[%s5 + $0xc] sm:$0xf]
          %v830 = vld [vmem:[%s9] sm:$0xf]
          %v831 = vld [vmem:[%s9 + $0x4] sm:$0xf]
          %v832 = vld [vmem:[%s9 + $0x8] sm:$0xf]
          %v833 = vld [vmem:[%s9 + $0xc] sm:$0xf]
          %v834 = vld [vmem:[#allocation2] sm:$0xff]
          %v835 = vmul.f32 %v834, 0.02
          %v836 = vpack.c.bf16 %v835, %v835
          %v837 = vld [vmem:[%s2] sm:$0x1]
          %v839 = vlaneseq
          %v840 = vshrl.u32 %v839, 7
          %v841 = vsub.s32 0, %v840
          %v842 = vrot.slane %v837, %v841
          %v852 = vunpack.c.l.b16 %v818
          %v853 = vunpack.c.l.b16 %v819
          %v854 = vunpack.c.l.b16 %v820
          %v855 = vunpack.c.l.b16 %v821
          %v856 = vunpack.c.l.b16 %v822
          %v857 = vunpack.c.l.b16 %v823
          %v858 = vunpack.c.l.b16 %v824
          %v859 = vunpack.c.l.b16 %v825
          %v860 = vpack.c.b16 %v853, %v852
          %v861 = vpack.c.b16 %v855, %v854
          %v862 = vpack.c.b16 %v857, %v856
          %v863 = vpack.c.b16 %v859, %v858
          %v869 = vsel %vm716, %v836, 0
          %871 = vmatprep.subr.bf16.mxu0 0
          %872 = vmatpush1.bf16.msra.mxu0 0
          %873 = vmatprep.subr.bf16.mxu0 0
          %874 = vmatpush1.bf16.msra.mxu0 0
          %875 = vmatprep.subr.bf16.mxu0 0
          %876 = vmatpush1.bf16.msra.mxu0 0
          %877 = vmatprep.subr.bf16.mxu0 0
          %878 = vmatpush1.bf16.msra.mxu0 0
          %879 = vmatprep.subr.bf16.mxu0 0
          %880 = vmatpush1.bf16.msra.mxu0 %v863
          %881 = vmatprep.subr.bf16.mxu0 0
          %882 = vmatpush1.bf16.msra.mxu0 %v862
          %883 = vmatprep.subr.bf16.mxu0 0
          %884 = vmatpush1.bf16.msra.mxu0 %v861
          %885 = vmatprep.subr.bf16.mxu0 0
          %886 = vmatpush1.bf16.msra.mxu0 %v860
          %887 = vmatprep.subr.bf16.mxu0 0
          %888 = vmatpush2.bf16.msra.mxu0 0
          %889 = vmatprep.subr.bf16.mxu0 0
          %890 = vmatpush2.bf16.msra.mxu0 0
          %891 = vmatprep.subr.bf16.mxu0 0
          %892 = vmatpush2.bf16.msra.mxu0 0
          %893 = vmatprep.subr.bf16.mxu0 0
          %894 = vmatpush2.bf16.msra.mxu0 0
          %895 = vmatprep.subr.bf16.mxu0 0
          %896 = vmatpush2.bf16.msra.mxu0 0
          %897 = vmatprep.subr.bf16.mxu0 0
          %898 = vmatpush2.bf16.msra.mxu0 0
          %899 = vmatprep.subr.bf16.mxu0 0
          %900 = vmatpush2.bf16.msra.mxu0 0
          %901 = vmatprep.subr.bf16.mxu0 0
          %902 = vmatpush2.bf16.msra.mxu0 0
          %903 = vmatprep.mubr.bf16.mxu0 0
          %904 = vmatmul.mubr.bf16.gmra.mxu0 %v869
          %v905 = vpop.f32.mrf.mxu0
          %v906 = vadd.f32 %v842, %v905
          %v907 = vpop.f32.mrf.mxu0
          %v908 = vpop.f32.mrf.mxu0
          %v909 = vpop.f32.mrf.mxu0
          %910 = vdwg.mxu0
          %v911 = vld [vmem:[%s3] sm:$0x1]
          %v912 = vld [vmem:[%s4] sm:$0x1]
          %vm913 = vcmask 261120
          %v914 = vsel %vm913, %v906, 0.0
          %915 = vadd.xlane.f32.xlu0 %v914
          %v916 = vpop.xlane.xlu0 %915
          %v917 = vrcp.pop 32.0
          %v918 = vmul.f32 %v916, %v917
          %v919 = vsub.f32 %v906, %v918
          %v920 = vmul.f32 %v919, %v919
          %v921 = vsel %vm913, %v920, 0.0
          %922 = vadd.xlane.f32.xlu0 %v921
          %v923 = vpop.xlane.xlu0 %922
          %v924 = vmul.f32 %v923, %v917
          %v925 = vadd.f32 %v924, 1e-05
          %v926 = vrsqrt.pop %v925
          %v927 = vmul.f32 %v919, %v926
          %v929 = vlaneseq
          %v930 = vshrl.u32 %v929, 7
          %v931 = vsub.s32 0, %v930
          %v932 = vrot.slane %v911, %v931
          %v934 = vmul.f32 %v927, %v932
          %v936 = vlaneseq
          %v937 = vshrl.u32 %v936, 7
          %v938 = vsub.s32 0, %v937
          %v939 = vrot.slane %v912, %v938
          %v941 = vadd.f32 %v934, %v939
          %v942 = vmul.f32 %v941, 0.5
          %v943 = vmul.f32 %v941, 0.70710677
          %vm944 = vcmp.ge.f32.partialorder %v943, 0.0
          %v945 = vsel %vm944, 1.0, -1.0
          %v946 = vand.u32 2147483647, %v943
          %v947 = vmul.f32 %v946, 0.3275911
          %v948 = vadd.f32 %v947, 1.0
          %v949 = vrcp.pop %v948
          %v950 = vmul.f32 1.0, %v949
          %v951 = vmul.f32 %v950, 1.0614054
          %v952 = vadd.f32 %v951, -1.4531521
          %v953 = vmul.f32 %v952, %v950
          %v954 = vadd.f32 %v953, 1.4214138
          %v955 = vmul.f32 %v954, %v950
          %v956 = vadd.f32 %v955, -0.28449672
          %v957 = vmul.f32 %v956, %v950
          %v958 = vadd.f32 %v957, 0.2548296
          %v959 = vmul.f32 %v958, %v950
          %v960 = vsub.f32 0.0, %v946
          %v961 = vmul.f32 %v960, %v946
          %v962 = vmul.f32 %v961, 1.442695
          %v963 = vpow.pop %v962
          %v964 = vmul.f32 %v959, %v963
          %v965 = vsub.f32 1.0, %v964
          %v966 = vmul.f32 %v945, %v965
          %v967 = vadd.f32 %v966, 1.0
          %v968 = vmul.f32 %v942, %v967
          %v969 = vpack.c.bf16 %v968, %v968
          %v970 = vld [vmem:[%s6] sm:$0x1]
          %v972 = vlaneseq
          %v973 = vshrl.u32 %v972, 7
          %v974 = vsub.s32 0, %v973
          %v975 = vrot.slane %v970, %v974
          %v981 = vunpack.c.l.b16 %v826
          %v982 = vunpack.c.l.b16 %v827
          %v983 = vunpack.c.l.b16 %v828
          %v984 = vunpack.c.l.b16 %v829
          %v985 = vpack.c.b16 %v982, %v981
          %v986 = vpack.c.b16 %v984, %v983
          %v990 = vsel %vm913, %v969, 0
          %992 = vmatprep.subr.bf16.mxu0 0
          %993 = vmatpush1.bf16.msra.mxu0 0
          %994 = vmatprep.subr.bf16.mxu0 0
          %995 = vmatpush1.bf16.msra.mxu0 0
          %996 = vmatprep.subr.bf16.mxu0 0
          %997 = vmatpush1.bf16.msra.mxu0 0
          %998 = vmatprep.subr.bf16.mxu0 0
          %999 = vmatpush1.bf16.msra.mxu0 0
          %1000 = vmatprep.subr.bf16.mxu0 0
          %1001 = vmatpush1.bf16.msra.mxu0 0
          %1002 = vmatprep.subr.bf16.mxu0 0
          %1003 = vmatpush1.bf16.msra.mxu0 0
          %1004 = vmatprep.subr.bf16.mxu0 0
          %1005 = vmatpush1.bf16.msra.mxu0 %v986
          %1006 = vmatprep.subr.bf16.mxu0 0
          %1007 = vmatpush1.bf16.msra.mxu0 %v985
          %1008 = vmatprep.subr.bf16.mxu0 0
          %1009 = vmatpush2.bf16.msra.mxu0 0
          %1010 = vmatprep.subr.bf16.mxu0 0
          %1011 = vmatpush2.bf16.msra.mxu0 0
          %1012 = vmatprep.subr.bf16.mxu0 0
          %1013 = vmatpush2.bf16.msra.mxu0 0
          %1014 = vmatprep.subr.bf16.mxu0 0
          %1015 = vmatpush2.bf16.msra.mxu0 0
          %1016 = vmatprep.subr.bf16.mxu0 0
          %1017 = vmatpush2.bf16.msra.mxu0 0
          %1018 = vmatprep.subr.bf16.mxu0 0
          %1019 = vmatpush2.bf16.msra.mxu0 0
          %1020 = vmatprep.subr.bf16.mxu0 0
          %1021 = vmatpush2.bf16.msra.mxu0 0
          %1022 = vmatprep.subr.bf16.mxu0 0
          %1023 = vmatpush2.bf16.msra.mxu0 0
          %1024 = vmatprep.mubr.bf16.mxu0 0
          %1025 = vmatmul.mubr.bf16.gmra.mxu0 %v990
          %v1026 = vpop.f32.mrf.mxu0
          %v1027 = vadd.f32 %v975, %v1026
          %v1028 = vpop.f32.mrf.mxu0
          %v1029 = vpop.f32.mrf.mxu0
          %v1030 = vpop.f32.mrf.mxu0
          %1031 = vdwg.mxu0
          %v1032 = vld [vmem:[%s7] sm:$0x1]
          %v1033 = vld [vmem:[%s8] sm:$0x1]
          %v1034 = vsel %vm913, %v1027, 0.0
          %1035 = vadd.xlane.f32.xlu0 %v1034
          %v1036 = vpop.xlane.xlu0 %1035
          %v1037 = vmul.f32 %v1036, %v917
          %v1038 = vsub.f32 %v1027, %v1037
          %v1039 = vmul.f32 %v1038, %v1038
          %v1040 = vsel %vm913, %v1039, 0.0
          %1041 = vadd.xlane.f32.xlu0 %v1040
          %v1042 = vpop.xlane.xlu0 %1041
          %v1043 = vmul.f32 %v1042, %v917
          %v1044 = vadd.f32 %v1043, 1e-05
          %v1045 = vrsqrt.pop %v1044
          %v1046 = vmul.f32 %v1038, %v1045
          %v1048 = vlaneseq
          %v1049 = vshrl.u32 %v1048, 7
          %v1050 = vsub.s32 0, %v1049
          %v1051 = vrot.slane %v1032, %v1050
          %v1053 = vmul.f32 %v1046, %v1051
          %v1055 = vlaneseq
          %v1056 = vshrl.u32 %v1055, 7
          %v1057 = vsub.s32 0, %v1056
          %v1058 = vrot.slane %v1033, %v1057
          %v1060 = vadd.f32 %v1053, %v1058
          %v1061 = vmul.f32 %v1060, 0.5
          %v1062 = vmul.f32 %v1060, 0.70710677
          %vm1063 = vcmp.ge.f32.partialorder %v1062, 0.0
          %v1064 = vsel %vm1063, 1.0, -1.0
          %v1065 = vand.u32 2147483647, %v1062
          %v1066 = vmul.f32 %v1065, 0.3275911
          %v1067 = vadd.f32 %v1066, 1.0
          %v1068 = vrcp.pop %v1067
          %v1069 = vmul.f32 1.0, %v1068
          %v1070 = vmul.f32 %v1069, 1.0614054
          %v1071 = vadd.f32 %v1070, -1.4531521
          %v1072 = vmul.f32 %v1071, %v1069
          %v1073 = vadd.f32 %v1072, 1.4214138
          %v1074 = vmul.f32 %v1073, %v1069
          %v1075 = vadd.f32 %v1074, -0.28449672
          %v1076 = vmul.f32 %v1075, %v1069
          %v1077 = vadd.f32 %v1076, 0.2548296
          %v1078 = vmul.f32 %v1077, %v1069
          %v1079 = vsub.f32 0.0, %v1065
          %v1080 = vmul.f32 %v1079, %v1065
          %v1081 = vmul.f32 %v1080, 1.442695
          %v1082 = vpow.pop %v1081
          %v1083 = vmul.f32 %v1078, %v1082
          %v1084 = vsub.f32 1.0, %v1083
          %v1085 = vmul.f32 %v1064, %v1084
          %v1086 = vadd.f32 %v1085, 1.0
          %v1087 = vmul.f32 %v1061, %v1086
          %v1088 = vpack.c.bf16 %v1087, %v1087
          %v1089 = vld [vmem:[%s10] sm:$0x1]
          %v1091 = vlaneseq
          %v1092 = vshrl.u32 %v1091, 7
          %v1093 = vsub.s32 0, %v1092
          %v1094 = vrot.slane %v1089, %v1093
          %v1100 = vunpack.c.l.b16 %v830
          %v1101 = vunpack.c.l.b16 %v831
          %v1102 = vunpack.c.l.b16 %v832
          %v1103 = vunpack.c.l.b16 %v833
          %v1104 = vpack.c.b16 %v1101, %v1100
          %v1105 = vpack.c.b16 %v1103, %v1102
          %v1109 = vsel %vm913, %v1088, 0
          %1111 = vmatprep.subr.bf16.mxu0 0
          %1112 = vmatpush1.bf16.msra.mxu0 0
          %1113 = vmatprep.subr.bf16.mxu0 0
          %1114 = vmatpush1.bf16.msra.mxu0 0
          %1115 = vmatprep.subr.bf16.mxu0 0
          %1116 = vmatpush1.bf16.msra.mxu0 0
          %1117 = vmatprep.subr.bf16.mxu0 0
          %1118 = vmatpush1.bf16.msra.mxu0 0
          %1119 = vmatprep.subr.bf16.mxu0 0
          %1120 = vmatpush1.bf16.msra.mxu0 0
          %1121 = vmatprep.subr.bf16.mxu0 0
          %1122 = vmatpush1.bf16.msra.mxu0 0
          %1123 = vmatprep.subr.bf16.mxu0 0
          %1124 = vmatpush1.bf16.msra.mxu0 %v1105
          %1125 = vmatprep.subr.bf16.mxu0 0
          %1126 = vmatpush1.bf16.msra.mxu0 %v1104
          %1127 = vmatprep.subr.bf16.mxu0 0
          %1128 = vmatpush2.bf16.msra.mxu0 0
          %1129 = vmatprep.subr.bf16.mxu0 0
          %1130 = vmatpush2.bf16.msra.mxu0 0
          %1131 = vmatprep.subr.bf16.mxu0 0
          %1132 = vmatpush2.bf16.msra.mxu0 0
          %1133 = vmatprep.subr.bf16.mxu0 0
          %1134 = vmatpush2.bf16.msra.mxu0 0
          %1135 = vmatprep.subr.bf16.mxu0 0
          %1136 = vmatpush2.bf16.msra.mxu0 0
          %1137 = vmatprep.subr.bf16.mxu0 0
          %1138 = vmatpush2.bf16.msra.mxu0 0
          %1139 = vmatprep.subr.bf16.mxu0 0
          %1140 = vmatpush2.bf16.msra.mxu0 0
          %1141 = vmatprep.subr.bf16.mxu0 0
          %1142 = vmatpush2.bf16.msra.mxu0 0
          %1143 = vmatprep.mubr.bf16.mxu0 0
          %1144 = vmatmul.mubr.bf16.gmra.mxu0 %v1109
          %v1145 = vpop.f32.mrf.mxu0
          %v1146 = vadd.f32 %v1094, %v1145
          %v1147 = vpop.f32.mrf.mxu0
          %v1148 = vpop.f32.mrf.mxu0
          %v1149 = vpop.f32.mrf.mxu0
          %1150 = vdwg.mxu0
          %vm1151 = vcmask 64512
          %1152 = vst.msk [vmem:[%s645] sm:$0xff] %vm1151, %v1146
        $region134: #{ssl_mlp_forward.1} parent=121 // pred_fallthru
          _
        %p1153 = scmp.lt.s32.totalorder %s26, 1
        %s1154 = scalar_select %p1153, %s26, 1
        %s1155 = smul.addr %s1154, 8
        %s1156 = scalar_lea.vmem %s11, %s1155
        // Predicated region
        $region135: #{ssl_mlp_forward.1} parent=121 // pred_check
          %p1157 = pneg %p290
        $region136: #{ssl_mlp_forward.1} parent=121 // pred_check_branch
          %1159 = sbr.rel (%p1157) target = $region138
        $region137: #{ssl_mlp_forward.1} parent=121 // pred_region
          _
        $region138: #{ssl_mlp_forward.1} parent=121 // pred_fallthru
          _
      $region122: #{ssl_mlp_forward.1} parent=5 // pred_fallthru
        _
      %p1160 = scmp.le.s32.totalorder 2, %s17
      // Predicated region
      $region139: #{ssl_mlp_forward.1} parent=5 // pred_check
        %p1161 = pneg %p1160
      $region140: #{ssl_mlp_forward.1} parent=5 // pred_check_branch
        %1163 = sbr.rel (%p1161) target = $region142
      $region141: #{ssl_mlp_forward.1} parent=5 // pred_region
        %s1164 = ssub.s32 %s17, 2
        // Predicated region
        $region143: #{ssl_mlp_forward.1} parent=141 // pred_check
          %p1165 = pneg %p296
        $region144: #{ssl_mlp_forward.1} parent=141 // pred_check_branch
          %1167 = sbr.rel (%p1165) target = $region146
        $region145: #{ssl_mlp_forward.1} parent=141 // pred_region
          %p1168 = scmp.lt.s32.totalorder %s28, 1
          %s1169 = scalar_select %p1168, %s28, 1
          %s1170 = smul.addr %s1169, 8
          %s1171 = scalar_lea.vmem %s11, %s1170
        $region146: #{ssl_mlp_forward.1} parent=141 // pred_fallthru
          _
      $region142: #{ssl_mlp_forward.1} parent=5 // pred_fallthru
        _
    $region6: #{ssl_mlp_forward.1} parent=1 // loop_footer
      %s21 = sadd.s32 1, %s17
    $region7: #{ssl_mlp_forward.1} parent=1 // loop_footer_branch
      %16 = sbr.rel target = $region3
    $region8: #{ssl_mlp_forward.1} parent=1 // loop_exit
      _

</llo_original>
